<compile_context>
chip_gen: v5e
topology: v5e:2x2
jax: 0.10.0
libtpu: 0.0.40
codegen_flags: <defaults>
</compile_context>

<pallas_src>
import functools

import jax
import jax.numpy as jnp
from jax.experimental import pallas as pl
from jax.experimental.pallas import tpu as pltpu


def vistr_kernel(src_ref, pos_ref, mask_ref, q_ref, qs_ref,
                 wpT_ref, bp_ref,
                 w1_ref, b1_ref, w2_ref, b2_ref,
                 wcp_ref, bcp_ref, w3p_ref, b3p_ref,
                 out_ref,
                 m_sc, l_sc, acc_sc,
                 *, hw):
    li = pl.program_id(1)
    hi = pl.program_id(2)
    first = jnp.logical_and(li == 0, hi == 0)
    last = jnp.logical_and(li == pl.num_programs(1) - 1,
                           hi == pl.num_programs(2) - 1)

    @pl.when(first)
    def _init():
        m_sc[...] = jnp.full_like(m_sc, -jnp.inf)
        l_sc[...] = jnp.zeros_like(l_sc)
        acc_sc[...] = jnp.zeros_like(acc_sc)

    ts = src_ref.shape[-1]                       # static tile width (tokens)
    src = src_ref[0, 0]                          # (Cb, ts) bf16, channel-major
    posT = pos_ref[0, 0]                         # (D, ts)  bf16
    padm = mask_ref[0, 0]                        # (1, ts)  bf16, 1.0 = padded

    # token validity: in-bounds within this frame's HW tokens AND not padded.
    col = jax.lax.broadcasted_iota(jnp.int32, (1, ts), 1) + hi * ts
    valid = jnp.logical_and(col < hw, padm < 0.5)          # (1, ts) bool

    # ---- input_proj: 1x1 Conv2d == per-token linear, done channel-major ----
    # memT = wp^T @ src  -> (D, ts); invalid columns zeroed (sanitizes OOB garbage).
    memT = jnp.dot(wpT_ref[...], src,
                   preferred_element_type=jnp.float32) + bp_ref[...]
    memT = jnp.where(valid, memT, 0.0)
    memT_bf = memT.astype(jnp.bfloat16)
    mem_posT = memT_bf + jnp.where(valid, posT, jnp.bfloat16(0))   # (D, ts) bf16

    # ---- single-head cross-attention readout (online softmax over tiles) ----
    scores = jnp.dot(qs_ref[...], mem_posT,
                     preferred_element_type=jnp.float32)           # (L, ts) f32
    scores = jnp.where(valid, scores, -1e9)

    m_prev = m_sc[...]
    m_new = jnp.maximum(m_prev, jnp.max(scores, axis=-1, keepdims=True))
    alpha = jnp.exp(m_prev - m_new)
    p = jnp.exp(scores - m_new)
    l_sc[...] = alpha * l_sc[...] + jnp.sum(p, axis=-1, keepdims=True)
    acc_sc[...] = alpha * acc_sc[...] + jax.lax.dot_general(
        p.astype(jnp.bfloat16), memT_bf,
        dimension_numbers=(((1,), (1,)), ((), ())),                # contract ts
        preferred_element_type=jnp.float32)                        # (L, D)
    m_sc[...] = m_new

    @pl.when(last)
    def _finalize():
        inv_l = pl.reciprocal(l_sc[...], approx=True)
        hs = q_ref[...] + acc_sc[...] * inv_l                      # (L, D) f32
        h = hs.astype(jnp.bfloat16)

        # class_embed: Linear(D, nc1), lane-padded to OUT_W (padded lanes -> 0)
        logits = jnp.dot(h, wcp_ref[...],
                         preferred_element_type=jnp.float32) + bcp_ref[...]

        # bbox_embed: MLP(D, D, 4, 3) + sigmoid; final layer lane-padded, padded
        # bias lanes are -1e4 so sigmoid -> 0 there and a single add packs both.
        h1 = jnp.maximum(jnp.dot(h, w1_ref[...],
                                 preferred_element_type=jnp.float32) + b1_ref[...], 0.0)
        h2 = jnp.maximum(jnp.dot(h1.astype(jnp.bfloat16), w2_ref[...],
                                 preferred_element_type=jnp.float32) + b2_ref[...], 0.0)
        box = jax.nn.sigmoid(jnp.dot(h2.astype(jnp.bfloat16), w3p_ref[...],
                                     preferred_element_type=jnp.float32) + b3p_ref[...])

        out_ref[0] = (logits + box).astype(out_ref.dtype)          # one unmasked store


def vistr_forward(src_nchw, pos_bldhw, mask_blhw, params, length):
    """src_nchw: [B*L, Cb, H, W], pos_bldhw: [B, L, D, H, W], mask_blhw: [B, L, H, W]."""
    n, cb, h_sp, w_sp = src_nchw.shape
    b = n // length
    L = length
    hw = h_sp * w_sp
    d = params["wp"].shape[1]
    nc1 = params["wc"].shape[1]
    out_w = max(128, pl.cdiv(nc1 + 4, 128) * 128)

    f32, bf16 = jnp.float32, jnp.bfloat16

    # Pure reshapes only -- no transpose, no pad, no extra HBM round trip.
    src = src_nchw.reshape(b, L, cb, hw).astype(bf16)       # channel-major tokens
    pos = pos_bldhw.reshape(b, L, d, hw).astype(bf16)
    mask = mask_blhw.reshape(b, L, 1, hw).astype(bf16)      # 1.0 = padded

    # Generation-aware tile sizing (128 MiB parts vs 64 MiB v7x).
    try:
        vmem_cap = int(pltpu.get_tpu_info().vmem_capacity_bytes)
    except Exception:
        vmem_cap = 64 << 20
    if vmem_cap >= (128 << 20):
        per_buf, vmem_limit = 16 << 20, 100 << 20
    else:
        per_buf, vmem_limit = 6 << 20, 48 << 20
    bytes_per_token = 2 * (cb + d) + 2
    ts_target = max(128, (per_buf // bytes_per_token) // 128 * 128)
    if hw <= ts_target:
        ts, n_hw = hw, 1
    else:
        ts = ts_target                      # multiple of 128; ragged tail masked in-kernel
        n_hw = pl.cdiv(hw, ts)

    q = params["query_embed"][:L].astype(f32)                       # (L, D) residual
    qs = (params["query_embed"][:L] * (1.0 / (d ** 0.5))).astype(bf16)  # pre-scaled

    wpT = params["wp"].T.astype(bf16)                               # (D, Cb)
    bp = params["bp"].reshape(d, 1).astype(f32)                     # (D, 1) column bias
    w1 = params["w1"].astype(bf16); b1 = params["b1"].astype(f32)
    w2 = params["w2"].astype(bf16); b2 = params["b2"].astype(f32)
    wcp = jnp.zeros((d, out_w), f32).at[:, :nc1].set(params["wc"]).astype(bf16)
    bcp = jnp.zeros((1, out_w), f32).at[:, :nc1].set(params["bc"])
    w3p = jnp.zeros((d, out_w), f32).at[:, nc1:nc1 + 4].set(params["w3"]).astype(bf16)
    b3p = jnp.full((1, out_w), -1e4, f32).at[:, nc1:nc1 + 4].set(params["b3"])

    def const_spec(a):
        zeros = (0,) * a.ndim
        return pl.BlockSpec(a.shape, lambda bi, li, hi, z=zeros: z)

    # TODO(synk): constant-index weight specs are still double-buffered; Buffered(1)
    # would shave a few MiB of VMEM on 64 MiB parts.
    grid_spec = pltpu.PrefetchScalarGridSpec(
        num_scalar_prefetch=0,
        grid=(b, L, n_hw),
        in_specs=[
            pl.BlockSpec((1, 1, cb, ts), lambda bi, li, hi: (bi, li, 0, hi)),   # src
            pl.BlockSpec((1, 1, d, ts), lambda bi, li, hi: (bi, li, 0, hi)),    # pos
            pl.BlockSpec((1, 1, 1, ts), lambda bi, li, hi: (bi, li, 0, hi)),    # mask
            const_spec(q), const_spec(qs),
            const_spec(wpT), const_spec(bp),
            const_spec(w1), const_spec(b1), const_spec(w2), const_spec(b2),
            const_spec(wcp), const_spec(bcp), const_spec(w3p), const_spec(b3p),
        ],
        out_specs=pl.BlockSpec((1, L, out_w), lambda bi, li, hi: (bi, 0, 0)),
        scratch_shapes=[
            pltpu.VMEM((L, 1), jnp.float32),     # m
            pltpu.VMEM((L, 1), jnp.float32),     # l
            pltpu.VMEM((L, d), jnp.float32),     # acc
        ],
    )

    S = L * hw
    flops = b * (2 * S * cb * d          # input_proj
                 + 4 * L * S * d         # QK^T + P@V
                 + 4 * L * d * d         # bbox MLP hidden layers
                 + 4 * L * d * out_w)    # class head + bbox final (lane-padded)
    transcendentals = b * (2 * L * S + L * out_w + L)
    bytes_accessed = ((src.size + pos.size + mask.size) * 2
                      + (wpT.size + w1.size + w2.size + wcp.size + w3p.size
                         + qs.size) * 2
                      + (bp.size + b1.size + b2.size + bcp.size + b3p.size
                         + q.size) * 4
                      + b * L * out_w * 4)

    packed = pl.pallas_call(
        functools.partial(vistr_kernel, hw=hw),
        grid_spec=grid_spec,
        out_shape=jax.ShapeDtypeStruct((b, L, out_w), jnp.float32),
        compiler_params=pltpu.CompilerParams(
            dimension_semantics=("parallel", "arbitrary", "arbitrary"),
            vmem_limit_bytes=vmem_limit),
        cost_estimate=pl.CostEstimate(flops=flops,
                                      transcendentals=transcendentals,
                                      bytes_accessed=bytes_accessed),
    )(src, pos, mask, q, qs, wpT, bp, w1, b1, w2, b2, wcp, bcp, w3p, b3p)

    return {"pred_logits": packed[:, :, :nc1],
            "pred_boxes": packed[:, :, nc1:nc1 + 4]}


def init_params(key, backbone_channels, hidden_dim, num_classes, num_frames):
    ks = jax.random.split(key, 10)
    s = 0.1
    return {
        # input_proj: Conv2d(backbone_channels, hidden_dim, 1) stored as (Cb, D)
        "wp": s * jax.random.normal(ks[0], (backbone_channels, hidden_dim), jnp.float32),
        "bp": s * jax.random.normal(ks[1], (1, hidden_dim), jnp.float32),
        # class_embed: Linear(hidden_dim, num_classes + 1) stored as (D, NC+1)
        "wc": s * jax.random.normal(ks[2], (hidden_dim, num_classes + 1), jnp.float32),
        "bc": s * jax.random.normal(ks[3], (1, num_classes + 1), jnp.float32),
        # bbox_embed: MLP(hidden, hidden, 4, 3)
        "w1": s * jax.random.normal(ks[4], (hidden_dim, hidden_dim), jnp.float32),
        "b1": s * jax.random.normal(ks[5], (1, hidden_dim), jnp.float32),
        "w2": s * jax.random.normal(ks[6], (hidden_dim, hidden_dim), jnp.float32),
        "b2": s * jax.random.normal(ks[7], (1, hidden_dim), jnp.float32),
        "w3": s * jax.random.normal(ks[8], (hidden_dim, 4), jnp.float32),
        "b3": s * jax.random.normal(ks[9], (1, 4), jnp.float32),
        # query_embed: nn.Embedding(num_frames, hidden_dim)
        "query_embed": s * jax.random.normal(jax.random.fold_in(key, 99),
                                             (num_frames, hidden_dim), jnp.float32),
    }


if __name__ == "__main__":
    B = 2               # batch of videos
    num_frames = 6      # length
    Cb = 4              # backbone.num_channels
    H = W = 8           # backbone feature map spatial size
    D = 32              # transformer.d_model (hidden_dim)
    num_classes = 3

    key = jax.random.PRNGKey(0)
    k_src, k_pos, k_par = jax.random.split(key, 3)

    # synthetic backbone outputs (features[-1] and pos[-1])
    src = jax.random.normal(k_src, (B * num_frames, Cb, H, W), jnp.float32)   # NCHW
    pos = jax.random.normal(k_pos, (B, num_frames, D, H, W), jnp.float32)
    mask = jnp.zeros((B, num_frames, H, W), jnp.float32)                      # all valid

    params = init_params(k_par, Cb, D, num_classes, num_frames)

    out = vistr_forward(src, pos, mask, params, num_frames)
    jax.block_until_ready(out)

    assert out["pred_logits"].shape == (B, num_frames, num_classes + 1)
    assert out["pred_boxes"].shape == (B, num_frames, 4)
    assert bool(jnp.all(jnp.isfinite(out["pred_logits"])))
    assert bool(jnp.all((out["pred_boxes"] >= 0.0) & (out["pred_boxes"] <= 1.0)))
    print("KERNEL_OK")
</pallas_src>

<mosaic_0001>
module attributes {stable_mosaic.version = 11 : i64} {
  func.func @vistr_kernel(%arg0: i32, %arg1: i32, %arg2: i32, %arg3: memref<1x1x4x64xbf16, #tpu.memory_space<vmem>>, %arg4: memref<1x1x32x64xbf16, #tpu.memory_space<vmem>>, %arg5: memref<1x1x1x64xbf16, #tpu.memory_space<vmem>>, %arg6: memref<6x32xf32, #tpu.memory_space<vmem>>, %arg7: memref<6x32xbf16, #tpu.memory_space<vmem>>, %arg8: memref<32x4xbf16, #tpu.memory_space<vmem>>, %arg9: memref<32x1xf32, #tpu.memory_space<vmem>>, %arg10: memref<32x32xbf16, #tpu.memory_space<vmem>>, %arg11: memref<1x32xf32, #tpu.memory_space<vmem>>, %arg12: memref<32x32xbf16, #tpu.memory_space<vmem>>, %arg13: memref<1x32xf32, #tpu.memory_space<vmem>>, %arg14: memref<32x128xbf16, #tpu.memory_space<vmem>>, %arg15: memref<1x128xf32, #tpu.memory_space<vmem>>, %arg16: memref<32x128xbf16, #tpu.memory_space<vmem>>, %arg17: memref<1x128xf32, #tpu.memory_space<vmem>>, %arg18: memref<1x6x128xf32, #tpu.memory_space<vmem>>, %arg19: memref<6x1xf32, #tpu.memory_space<vmem>>, %arg20: memref<6x1xf32, #tpu.memory_space<vmem>>, %arg21: memref<6x32xf32, #tpu.memory_space<vmem>>) attributes {dimension_semantics = [#tpu.dimension_semantics<parallel>, #tpu.dimension_semantics<arbitrary>, #tpu.dimension_semantics<arbitrary>], iteration_bounds = array<i64: 2, 6, 1>, scalar_prefetch = 0 : i64, scratch_operands = 3 : i64, tpu.core_type = #tpu.core_type<tc>, window_params = [{transform_indices = @transform_0, window_bounds = array<i64: 1, 1, 4, 64>}, {transform_indices = @transform_1, window_bounds = array<i64: 1, 1, 32, 64>}, {transform_indices = @transform_2, window_bounds = array<i64: 1, 1, 1, 64>}, {pipeline_mode = #tpu.pipeline_mode<synchronous>, transform_indices = @transform_3, window_bounds = array<i64: 6, 32>}, {pipeline_mode = #tpu.pipeline_mode<synchronous>, transform_indices = @transform_4, window_bounds = array<i64: 6, 32>}, {pipeline_mode = #tpu.pipeline_mode<synchronous>, transform_indices = @transform_5, window_bounds = array<i64: 32, 4>}, {pipeline_mode = #tpu.pipeline_mode<synchronous>, transform_indices = @transform_6, window_bounds = array<i64: 32, 1>}, {pipeline_mode = #tpu.pipeline_mode<synchronous>, transform_indices = @transform_7, window_bounds = array<i64: 32, 32>}, {pipeline_mode = #tpu.pipeline_mode<synchronous>, transform_indices = @transform_8, window_bounds = array<i64: 1, 32>}, {pipeline_mode = #tpu.pipeline_mode<synchronous>, transform_indices = @transform_9, window_bounds = array<i64: 32, 32>}, {pipeline_mode = #tpu.pipeline_mode<synchronous>, transform_indices = @transform_10, window_bounds = array<i64: 1, 32>}, {pipeline_mode = #tpu.pipeline_mode<synchronous>, transform_indices = @transform_11, window_bounds = array<i64: 32, 128>}, {pipeline_mode = #tpu.pipeline_mode<synchronous>, transform_indices = @transform_12, window_bounds = array<i64: 1, 128>}, {pipeline_mode = #tpu.pipeline_mode<synchronous>, transform_indices = @transform_13, window_bounds = array<i64: 32, 128>}, {pipeline_mode = #tpu.pipeline_mode<synchronous>, transform_indices = @transform_14, window_bounds = array<i64: 1, 128>}, {transform_indices = @transform_15, window_bounds = array<i64: 1, 6, 128>}]} {
    %c0_i32 = arith.constant 0 : i32
    %0 = arith.cmpi eq, %arg1, %c0_i32 : i32
    %c0_i32_0 = arith.constant 0 : i32
    %1 = arith.cmpi eq, %arg2, %c0_i32_0 : i32
    %2 = arith.andi %0, %1 : i1
    %c5_i32 = arith.constant 5 : i32
    %3 = arith.cmpi eq, %arg1, %c5_i32 : i32
    %c0_i32_1 = arith.constant 0 : i32
    %4 = arith.cmpi eq, %arg2, %c0_i32_1 : i32
    %5 = arith.andi %3, %4 : i1
    %6 = arith.extui %2 : i1 to i32
    %c0_i32_2 = arith.constant 0 : i32
    %7 = arith.cmpi ne, %6, %c0_i32_2 : i32
    scf.if %7 {
      %cst_42 = arith.constant 0xFF800000 : f32
      %69 = vector.broadcast %cst_42 : f32 to vector<6x1xf32>
      %c0_43 = arith.constant 0 : index
      %c0_44 = arith.constant 0 : index
      %70 = vector.load %arg19[%c0_43, %c0_44] : memref<6x1xf32, #tpu.memory_space<vmem>>, vector<6x1xf32>
      tpu.vector_store %arg19[%c0_43, %c0_44], %69 {strides = array<i32>} : memref<6x1xf32, #tpu.memory_space<vmem>>, vector<6x1xf32>,
      %cst_45 = arith.constant 0.000000e+00 : f32
      %71 = vector.broadcast %cst_45 : f32 to vector<6x1xf32>
      %c0_46 = arith.constant 0 : index
      %c0_47 = arith.constant 0 : index
      %72 = vector.load %arg20[%c0_46, %c0_47] : memref<6x1xf32, #tpu.memory_space<vmem>>, vector<6x1xf32>
      tpu.vector_store %arg20[%c0_46, %c0_47], %71 {strides = array<i32>} : memref<6x1xf32, #tpu.memory_space<vmem>>, vector<6x1xf32>,
      %cst_48 = arith.constant 0.000000e+00 : f32
      %73 = vector.broadcast %cst_48 : f32 to vector<6x32xf32>
      %c0_49 = arith.constant 0 : index
      %c0_50 = arith.constant 0 : index
      %74 = vector.load %arg21[%c0_49, %c0_50] : memref<6x32xf32, #tpu.memory_space<vmem>>, vector<6x32xf32>
      tpu.vector_store %arg21[%c0_49, %c0_50], %73 {strides = array<i32>} : memref<6x32xf32, #tpu.memory_space<vmem>>, vector<6x32xf32>,
    } else {
    }
    %c0 = arith.constant 0 : index
    %c0_3 = arith.constant 0 : index
    %c0_4 = arith.constant 0 : index
    %c0_5 = arith.constant 0 : index
    %8 = vector.load %arg3[%c0, %c0_3, %c0_4, %c0_5] : memref<1x1x4x64xbf16, #tpu.memory_space<vmem>>, vector<1x1x4x64xbf16>
    %9 = vector.shape_cast %8 : vector<1x1x4x64xbf16> to vector<4x64xbf16>
    %c0_6 = arith.constant 0 : index
    %c0_7 = arith.constant 0 : index
    %c0_8 = arith.constant 0 : index
    %c0_9 = arith.constant 0 : index
    %10 = vector.load %arg4[%c0_6, %c0_7, %c0_8, %c0_9] : memref<1x1x32x64xbf16, #tpu.memory_space<vmem>>, vector<1x1x32x64xbf16>
    %11 = vector.shape_cast %10 : vector<1x1x32x64xbf16> to vector<32x64xbf16>
    %c0_10 = arith.constant 0 : index
    %c0_11 = arith.constant 0 : index
    %c0_12 = arith.constant 0 : index
    %c0_13 = arith.constant 0 : index
    %12 = vector.load %arg5[%c0_10, %c0_11, %c0_12, %c0_13] : memref<1x1x1x64xbf16, #tpu.memory_space<vmem>>, vector<1x1x1x64xbf16>
    %13 = vector.shape_cast %12 : vector<1x1x1x64xbf16> to vector<1x64xbf16>
    %14 = tpu.iota {dimensions = array<i32: 1>} : vector<1x64xi32>
    %c64_i32 = arith.constant 64 : i32
    %15 = arith.muli %arg2, %c64_i32 : i32
    %16 = vector.broadcast %15 : i32 to vector<1x64xi32>
    %17 = arith.addi %14, %16 : vector<1x64xi32>
    %c64_i32_14 = arith.constant 64 : i32
    %18 = vector.broadcast %c64_i32_14 : i32 to vector<1x64xi32>
    %19 = arith.cmpi slt, %17, %18 : vector<1x64xi32>
    %cst = arith.constant 5.000000e-01 : bf16
    %20 = vector.broadcast %cst : bf16 to vector<1x64xbf16>
    %21 = arith.cmpf olt, %13, %20 : vector<1x64xbf16>
    %22 = arith.andi %19, %21 : vector<1x64xi1>
    %c0_15 = arith.constant 0 : index
    %c0_16 = arith.constant 0 : index
    %23 = vector.load %arg8[%c0_15, %c0_16] : memref<32x4xbf16, #tpu.memory_space<vmem>>, vector<32x4xbf16>
    %cst_17 = arith.constant dense<0.000000e+00> : vector<32x64xf32>
    %24 = tpu.matmul %23, %9, %cst_17 {dimension_numbers = #tpu.dot_dimension_numbers<[1], [0], [0], [1], [0, 0, 1, 1], [], []>} : vector<32x4xbf16>, vector<4x64xbf16>, vector<32x64xf32> -> vector<32x64xf32>
    %c0_18 = arith.constant 0 : index
    %c0_19 = arith.constant 0 : index
    %25 = vector.load %arg9[%c0_18, %c0_19] : memref<32x1xf32, #tpu.memory_space<vmem>>, vector<32x1xf32>
    %26 = vector.broadcast %25 : vector<32x1xf32> to vector<32x64xf32>
    %27 = arith.addf %24, %26 : vector<32x64xf32>
    %cst_20 = arith.constant 0.000000e+00 : f32
    %28 = vector.shape_cast %22 : vector<1x64xi1> to vector<1x64xi1>
    %29 = vector.broadcast %28 : vector<1x64xi1> to vector<32x64xi1>
    %30 = vector.broadcast %cst_20 : f32 to vector<32x64xf32>
    %31 = arith.select %29, %27, %30 : vector<32x64xi1>, vector<32x64xf32>
    %32 = arith.truncf %31 : vector<32x64xf32> to vector<32x64xbf16>
    %cst_21 = arith.constant 0.000000e+00 : bf16
    %33 = vector.shape_cast %22 : vector<1x64xi1> to vector<1x64xi1>
    %34 = vector.broadcast %33 : vector<1x64xi1> to vector<32x64xi1>
    %35 = vector.broadcast %cst_21 : bf16 to vector<32x64xbf16>
    %36 = arith.select %34, %11, %35 : vector<32x64xi1>, vector<32x64xbf16>
    %37 = arith.addf %32, %36 : vector<32x64xbf16>
    %c0_22 = arith.constant 0 : index
    %c0_23 = arith.constant 0 : index
    %38 = vector.load %arg7[%c0_22, %c0_23] : memref<6x32xbf16, #tpu.memory_space<vmem>>, vector<6x32xbf16>
    %cst_24 = arith.constant dense<0.000000e+00> : vector<6x64xf32>
    %39 = tpu.matmul %38, %37, %cst_24 {dimension_numbers = #tpu.dot_dimension_numbers<[1], [0], [0], [1], [0, 0, 1, 1], [], []>} : vector<6x32xbf16>, vector<32x64xbf16>, vector<6x64xf32> -> vector<6x64xf32>
    %cst_25 = arith.constant -1.000000e+09 : f32
    %40 = vector.shape_cast %22 : vector<1x64xi1> to vector<1x64xi1>
    %41 = vector.broadcast %40 : vector<1x64xi1> to vector<6x64xi1>
    %42 = vector.broadcast %cst_25 : f32 to vector<6x64xf32>
    %43 = arith.select %41, %39, %42 : vector<6x64xi1>, vector<6x64xf32>
    %c0_26 = arith.constant 0 : index
    %c0_27 = arith.constant 0 : index
    %44 = vector.load %arg19[%c0_26, %c0_27] : memref<6x1xf32, #tpu.memory_space<vmem>>, vector<6x1xf32>
    %cst_28 = arith.constant dense<0xFF800000> : vector<6xf32>
    %45 = vector.multi_reduction <maximumf>, %43, %cst_28 [1] : vector<6x64xf32> to vector<6xf32>
    %46 = vector.shape_cast %45 : vector<6xf32> to vector<6x1xf32>
    %47 = arith.maximumf %44, %46 : vector<6x1xf32>
    %48 = arith.subf %44, %47 : vector<6x1xf32>
    %49 = math.exp %48 : vector<6x1xf32>
    %50 = vector.broadcast %47 : vector<6x1xf32> to vector<6x64xf32>
    %51 = arith.subf %43, %50 : vector<6x64xf32>
    %52 = math.exp %51 : vector<6x64xf32>
    %c0_29 = arith.constant 0 : index
    %c0_30 = arith.constant 0 : index
    %53 = vector.load %arg20[%c0_29, %c0_30] : memref<6x1xf32, #tpu.memory_space<vmem>>, vector<6x1xf32>
    %54 = arith.mulf %49, %53 : vector<6x1xf32>
    %cst_31 = arith.constant dense<0.000000e+00> : vector<6xf32>
    %55 = vector.multi_reduction <add>, %52, %cst_31 [1] : vector<6x64xf32> to vector<6xf32>
    %56 = vector.shape_cast %55 : vector<6xf32> to vector<6x1xf32>
    %57 = arith.addf %54, %56 : vector<6x1xf32>
    %c0_32 = arith.constant 0 : index
    %c0_33 = arith.constant 0 : index
    %58 = vector.load %arg20[%c0_32, %c0_33] : memref<6x1xf32, #tpu.memory_space<vmem>>, vector<6x1xf32>
    tpu.vector_store %arg20[%c0_32, %c0_33], %57 {strides = array<i32>} : memref<6x1xf32, #tpu.memory_space<vmem>>, vector<6x1xf32>,
    %c0_34 = arith.constant 0 : index
    %c0_35 = arith.constant 0 : index
    %59 = vector.load %arg21[%c0_34, %c0_35] : memref<6x32xf32, #tpu.memory_space<vmem>>, vector<6x32xf32>
    %60 = vector.broadcast %49 : vector<6x1xf32> to vector<6x32xf32>
    %61 = arith.mulf %60, %59 : vector<6x32xf32>
    %62 = arith.truncf %52 : vector<6x64xf32> to vector<6x64xbf16>
    %cst_36 = arith.constant dense<0.000000e+00> : vector<6x32xf32>
    %63 = tpu.matmul %62, %32, %cst_36 {dimension_numbers = #tpu.dot_dimension_numbers<[1], [1], [0], [0], [0, 0, 1, 0], [], []>} : vector<6x64xbf16>, vector<32x64xbf16>, vector<6x32xf32> -> vector<6x32xf32>
    %64 = arith.addf %61, %63 : vector<6x32xf32>
    %c0_37 = arith.constant 0 : index
    %c0_38 = arith.constant 0 : index
    %65 = vector.load %arg21[%c0_37, %c0_38] : memref<6x32xf32, #tpu.memory_space<vmem>>, vector<6x32xf32>
    tpu.vector_store %arg21[%c0_37, %c0_38], %64 {strides = array<i32>} : memref<6x32xf32, #tpu.memory_space<vmem>>, vector<6x32xf32>,
    %c0_39 = arith.constant 0 : index
    %c0_40 = arith.constant 0 : index
    %66 = vector.load %arg19[%c0_39, %c0_40] : memref<6x1xf32, #tpu.memory_space<vmem>>, vector<6x1xf32>
    tpu.vector_store %arg19[%c0_39, %c0_40], %47 {strides = array<i32>} : memref<6x1xf32, #tpu.memory_space<vmem>>, vector<6x1xf32>,
    %67 = arith.extui %5 : i1 to i32
    %c0_i32_41 = arith.constant 0 : i32
    %68 = arith.cmpi ne, %67, %c0_i32_41 : i32
    scf.if %68 {
      %c0_42 = arith.constant 0 : index
      %c0_43 = arith.constant 0 : index
      %69 = vector.load %arg20[%c0_42, %c0_43] : memref<6x1xf32, #tpu.memory_space<vmem>>, vector<6x1xf32>
      %70 = tpu.reciprocal %69 {approx = true} : vector<6x1xf32> -> vector<6x1xf32>
      %c0_44 = arith.constant 0 : index
      %c0_45 = arith.constant 0 : index
      %71 = vector.load %arg6[%c0_44, %c0_45] : memref<6x32xf32, #tpu.memory_space<vmem>>, vector<6x32xf32>
      %c0_46 = arith.constant 0 : index
      %c0_47 = arith.constant 0 : index
      %72 = vector.load %arg21[%c0_46, %c0_47] : memref<6x32xf32, #tpu.memory_space<vmem>>, vector<6x32xf32>
      %73 = vector.broadcast %70 : vector<6x1xf32> to vector<6x32xf32>
      %74 = arith.mulf %72, %73 : vector<6x32xf32>
      %75 = arith.addf %71, %74 : vector<6x32xf32>
      %76 = arith.truncf %75 : vector<6x32xf32> to vector<6x32xbf16>
      %c0_48 = arith.constant 0 : index
      %c0_49 = arith.constant 0 : index
      %77 = vector.load %arg14[%c0_48, %c0_49] : memref<32x128xbf16, #tpu.memory_space<vmem>>, vector<32x128xbf16>
      %cst_50 = arith.constant dense<0.000000e+00> : vector<6x128xf32>
      %78 = tpu.matmul %76, %77, %cst_50 {dimension_numbers = #tpu.dot_dimension_numbers<[1], [0], [0], [1], [0, 0, 1, 1], [], []>} : vector<6x32xbf16>, vector<32x128xbf16>, vector<6x128xf32> -> vector<6x128xf32>
      %c0_51 = arith.constant 0 : index
      %c0_52 = arith.constant 0 : index
      %79 = vector.load %arg15[%c0_51, %c0_52] : memref<1x128xf32, #tpu.memory_space<vmem>>, vector<1x128xf32>
      %80 = vector.broadcast %79 : vector<1x128xf32> to vector<6x128xf32>
      %81 = arith.addf %78, %80 : vector<6x128xf32>
      %c0_53 = arith.constant 0 : index
      %c0_54 = arith.constant 0 : index
      %82 = vector.load %arg10[%c0_53, %c0_54] : memref<32x32xbf16, #tpu.memory_space<vmem>>, vector<32x32xbf16>
      %cst_55 = arith.constant dense<0.000000e+00> : vector<6x32xf32>
      %83 = tpu.matmul %76, %82, %cst_55 {dimension_numbers = #tpu.dot_dimension_numbers<[1], [0], [0], [1], [0, 0, 1, 1], [], []>} : vector<6x32xbf16>, vector<32x32xbf16>, vector<6x32xf32> -> vector<6x32xf32>
      %c0_56 = arith.constant 0 : index
      %c0_57 = arith.constant 0 : index
      %84 = vector.load %arg11[%c0_56, %c0_57] : memref<1x32xf32, #tpu.memory_space<vmem>>, vector<1x32xf32>
      %85 = vector.broadcast %84 : vector<1x32xf32> to vector<6x32xf32>
      %86 = arith.addf %83, %85 : vector<6x32xf32>
      %cst_58 = arith.constant 0.000000e+00 : f32
      %87 = vector.broadcast %cst_58 : f32 to vector<6x32xf32>
      %88 = arith.maximumf %86, %87 : vector<6x32xf32>
      %89 = arith.truncf %88 : vector<6x32xf32> to vector<6x32xbf16>
      %c0_59 = arith.constant 0 : index
      %c0_60 = arith.constant 0 : index
      %90 = vector.load %arg12[%c0_59, %c0_60] : memref<32x32xbf16, #tpu.memory_space<vmem>>, vector<32x32xbf16>
      %cst_61 = arith.constant dense<0.000000e+00> : vector<6x32xf32>
      %91 = tpu.matmul %89, %90, %cst_61 {dimension_numbers = #tpu.dot_dimension_numbers<[1], [0], [0], [1], [0, 0, 1, 1], [], []>} : vector<6x32xbf16>, vector<32x32xbf16>, vector<6x32xf32> -> vector<6x32xf32>
      %c0_62 = arith.constant 0 : index
      %c0_63 = arith.constant 0 : index
      %92 = vector.load %arg13[%c0_62, %c0_63] : memref<1x32xf32, #tpu.memory_space<vmem>>, vector<1x32xf32>
      %93 = vector.broadcast %92 : vector<1x32xf32> to vector<6x32xf32>
      %94 = arith.addf %91, %93 : vector<6x32xf32>
      %cst_64 = arith.constant 0.000000e+00 : f32
      %95 = vector.broadcast %cst_64 : f32 to vector<6x32xf32>
      %96 = arith.maximumf %94, %95 : vector<6x32xf32>
      %97 = arith.truncf %96 : vector<6x32xf32> to vector<6x32xbf16>
      %c0_65 = arith.constant 0 : index
      %c0_66 = arith.constant 0 : index
      %98 = vector.load %arg16[%c0_65, %c0_66] : memref<32x128xbf16, #tpu.memory_space<vmem>>, vector<32x128xbf16>
      %cst_67 = arith.constant dense<0.000000e+00> : vector<6x128xf32>
      %99 = tpu.matmul %97, %98, %cst_67 {dimension_numbers = #tpu.dot_dimension_numbers<[1], [0], [0], [1], [0, 0, 1, 1], [], []>} : vector<6x32xbf16>, vector<32x128xbf16>, vector<6x128xf32> -> vector<6x128xf32>
      %c0_68 = arith.constant 0 : index
      %c0_69 = arith.constant 0 : index
      %100 = vector.load %arg17[%c0_68, %c0_69] : memref<1x128xf32, #tpu.memory_space<vmem>>, vector<1x128xf32>
      %101 = vector.broadcast %100 : vector<1x128xf32> to vector<6x128xf32>
      %102 = arith.addf %99, %101 : vector<6x128xf32>
      %103 = arith.negf %102 : vector<6x128xf32>
      %104 = math.exp %103 : vector<6x128xf32>
      %cst_70 = arith.constant 1.000000e+00 : f32
      %105 = vector.broadcast %cst_70 : f32 to vector<6x128xf32>
      %106 = arith.addf %105, %104 : vector<6x128xf32>
      %107 = arith.divf %105, %106 : vector<6x128xf32>
      %108 = arith.addf %81, %107 : vector<6x128xf32>
      %c0_71 = arith.constant 0 : index
      %c0_72 = arith.constant 0 : index
      %c0_73 = arith.constant 0 : index
      %109 = vector.load %arg18[%c0_71, %c0_72, %c0_73] : memref<1x6x128xf32, #tpu.memory_space<vmem>>, vector<1x6x128xf32>
      %110 = vector.shape_cast %109 : vector<1x6x128xf32> to vector<6x128xf32>
      %111 = vector.shape_cast %108 : vector<6x128xf32> to vector<1x6x128xf32>
      tpu.vector_store %arg18[%c0_71, %c0_72, %c0_73], %111 {strides = array<i32>} : memref<1x6x128xf32, #tpu.memory_space<vmem>>, vector<1x6x128xf32>,
    } else {
    }
    return
  }
  func.func @transform_0(%arg0: i32, %arg1: i32, %arg2: i32) -> (i32, i32, i32, i32) {
    %c0_i32 = arith.constant 0 : i32
    %c0_i32_0 = arith.constant 0 : i32
    return %arg0, %arg1, %c0_i32, %arg2 : i32, i32, i32, i32
  }
  func.func @transform_1(%arg0: i32, %arg1: i32, %arg2: i32) -> (i32, i32, i32, i32) {
    %c0_i32 = arith.constant 0 : i32
    %c0_i32_0 = arith.constant 0 : i32
    return %arg0, %arg1, %c0_i32, %arg2 : i32, i32, i32, i32
  }
  func.func @transform_2(%arg0: i32, %arg1: i32, %arg2: i32) -> (i32, i32, i32, i32) {
    %c0_i32 = arith.constant 0 : i32
    %c0_i32_0 = arith.constant 0 : i32
    return %arg0, %arg1, %c0_i32, %arg2 : i32, i32, i32, i32
  }
  func.func @transform_3(%arg0: i32, %arg1: i32, %arg2: i32) -> (i32, i32) {
    %c0_i32 = arith.constant 0 : i32
    %c0_i32_0 = arith.constant 0 : i32
    %c0_i32_1 = arith.constant 0 : i32
    return %c0_i32, %c0_i32_0 : i32, i32
  }
  func.func @transform_4(%arg0: i32, %arg1: i32, %arg2: i32) -> (i32, i32) {
    %c0_i32 = arith.constant 0 : i32
    %c0_i32_0 = arith.constant 0 : i32
    %c0_i32_1 = arith.constant 0 : i32
    return %c0_i32, %c0_i32_0 : i32, i32
  }
  func.func @transform_5(%arg0: i32, %arg1: i32, %arg2: i32) -> (i32, i32) {
    %c0_i32 = arith.constant 0 : i32
    %c0_i32_0 = arith.constant 0 : i32
    %c0_i32_1 = arith.constant 0 : i32
    return %c0_i32, %c0_i32_0 : i32, i32
  }
  func.func @transform_6(%arg0: i32, %arg1: i32, %arg2: i32) -> (i32, i32) {
    %c0_i32 = arith.constant 0 : i32
    %c0_i32_0 = arith.constant 0 : i32
    %c0_i32_1 = arith.constant 0 : i32
    return %c0_i32, %c0_i32_0 : i32, i32
  }
  func.func @transform_7(%arg0: i32, %arg1: i32, %arg2: i32) -> (i32, i32) {
    %c0_i32 = arith.constant 0 : i32
    %c0_i32_0 = arith.constant 0 : i32
    %c0_i32_1 = arith.constant 0 : i32
    return %c0_i32, %c0_i32_0 : i32, i32
  }
  func.func @transform_8(%arg0: i32, %arg1: i32, %arg2: i32) -> (i32, i32) {
    %c0_i32 = arith.constant 0 : i32
    %c0_i32_0 = arith.constant 0 : i32
    %c0_i32_1 = arith.constant 0 : i32
    return %c0_i32, %c0_i32_0 : i32, i32
  }
  func.func @transform_9(%arg0: i32, %arg1: i32, %arg2: i32) -> (i32, i32) {
    %c0_i32 = arith.constant 0 : i32
    %c0_i32_0 = arith.constant 0 : i32
    %c0_i32_1 = arith.constant 0 : i32
    return %c0_i32, %c0_i32_0 : i32, i32
  }
  func.func @transform_10(%arg0: i32, %arg1: i32, %arg2: i32) -> (i32, i32) {
    %c0_i32 = arith.constant 0 : i32
    %c0_i32_0 = arith.constant 0 : i32
    %c0_i32_1 = arith.constant 0 : i32
    return %c0_i32, %c0_i32_0 : i32, i32
  }
  func.func @transform_11(%arg0: i32, %arg1: i32, %arg2: i32) -> (i32, i32) {
    %c0_i32 = arith.constant 0 : i32
    %c0_i32_0 = arith.constant 0 : i32
    %c0_i32_1 = arith.constant 0 : i32
    return %c0_i32, %c0_i32_0 : i32, i32
  }
  func.func @transform_12(%arg0: i32, %arg1: i32, %arg2: i32) -> (i32, i32) {
    %c0_i32 = arith.constant 0 : i32
    %c0_i32_0 = arith.constant 0 : i32
    %c0_i32_1 = arith.constant 0 : i32
    return %c0_i32, %c0_i32_0 : i32, i32
  }
  func.func @transform_13(%arg0: i32, %arg1: i32, %arg2: i32) -> (i32, i32) {
    %c0_i32 = arith.constant 0 : i32
    %c0_i32_0 = arith.constant 0 : i32
    %c0_i32_1 = arith.constant 0 : i32
    return %c0_i32, %c0_i32_0 : i32, i32
  }
  func.func @transform_14(%arg0: i32, %arg1: i32, %arg2: i32) -> (i32, i32) {
    %c0_i32 = arith.constant 0 : i32
    %c0_i32_0 = arith.constant 0 : i32
    %c0_i32_1 = arith.constant 0 : i32
    return %c0_i32, %c0_i32_0 : i32, i32
  }
  func.func @transform_15(%arg0: i32, %arg1: i32, %arg2: i32) -> (i32, i32, i32) {
    %c0_i32 = arith.constant 0 : i32
    %c0_i32_0 = arith.constant 0 : i32
    %c0_i32_1 = arith.constant 0 : i32
    return %arg0, %c0_i32, %c0_i32_0 : i32, i32, i32
  }
}

</mosaic_0001>

<llo_original>
// kernel: tpu_custom_call.1
$region0: #{tpu_custom_call.1}
  #allocation0 [shape = 'u32[]', space=smem, size = 0x4, offset = 0x4, fixed_abs, tag = 'smem constant byte address 0x4 - core index']
  #allocation1 [shape = 'u32[72,128]{1,0:T(1,128)}', space=vmem, size = 0x9000, scoped, tag = 'internal scratch']
  #allocation2 [shape = 'f32[6,1]{1,0:T(8,128)}', space=vmem, size = 0x1000, scoped, tag = 'scratch operand']
  #allocation3 [shape = 'f32[6,1]{1,0:T(8,128)}', space=vmem, size = 0x1000, scoped, tag = 'scratch operand']
  #allocation4 [shape = 'f32[6,32]{1,0:T(8,128)}', space=vmem, size = 0x1000, scoped, tag = 'scratch operand']
  %s0 = inlined_call_operand.vmem [shape: bf16[2,6,4,64], index: 0, kind: input, shape index: {}]
  %s1 = inlined_call_operand.hbm [shape: bf16[2,6,32,64], index: 1, kind: input, shape index: {}]
  %s2 = inlined_call_operand.vmem [shape: bf16[2,6,1,64], index: 2, kind: input, shape index: {}]
  %s3 = inlined_call_operand.hbm [shape: f32[6,32], index: 3, kind: input, shape index: {}]
  %s4 = inlined_call_operand.hbm [shape: bf16[6,32], index: 4, kind: input, shape index: {}]
  %s5 = inlined_call_operand.vmem [shape: bf16[32,4], index: 5, kind: input, shape index: {}]
  %s6 = inlined_call_operand.vmem [shape: f32[32,1], index: 6, kind: input, shape index: {}]
  %s7 = inlined_call_operand.vmem [shape: bf16[32,32], index: 7, kind: input, shape index: {}]
  %s8 = inlined_call_operand.vmem [shape: f32[1,32], index: 8, kind: input, shape index: {}]
  %s9 = inlined_call_operand.vmem [shape: bf16[32,32], index: 9, kind: input, shape index: {}]
  %s10 = inlined_call_operand.vmem [shape: f32[1,32], index: 10, kind: input, shape index: {}]
  %s11 = inlined_call_operand.vmem [shape: bf16[32,128], index: 11, kind: input, shape index: {}]
  %s12 = inlined_call_operand.vmem [shape: f32[1,128], index: 12, kind: input, shape index: {}]
  %s13 = inlined_call_operand.hbm [shape: bf16[32,128], index: 13, kind: input, shape index: {}]
  %s14 = inlined_call_operand.vmem [shape: f32[1,128], index: 14, kind: input, shape index: {}]
  %s15 = inlined_call_operand.vmem [shape: f32[2,6,128], index: 15, kind: output, shape index: {}]
  %s16 = sld [smem:[#allocation0]]
  $region117: #{tpu_custom_call.1} parent=0
    _
  %s18 = ssub.s32 1, %s16
  %s19 = scalar_select 0, %s18, %s16
  $region1: #{tpu_custom_call.1} parent=0
    #allocation5 [shape = 'u8[16384]{0}', space=vmem, size = 0x4000, scoped, tag = 'input window, operand 1']
    #allocation6 [shape = 's32[2]{0}', space=sflag, size = 0x8, scoped, tag = 'scoped memory for tpu_custom_call.1']
    #allocation7 [shape = 'u8[4096]{0}', space=vmem, size = 0x1000, scoped, tag = 'input window, operand 3, single buffered']
    #allocation8 [shape = 's32[1]{0}', space=sflag, size = 0x4, scoped, tag = 'scoped memory for tpu_custom_call.1']
    #allocation9 [shape = 'u8[2048]{0}', space=vmem, size = 0x800, scoped, tag = 'input window, operand 4, single buffered']
    #allocation10 [shape = 'u8[8192]{0}', space=vmem, size = 0x2000, scoped, tag = 'input window, operand 13, single buffered']
    #allocation11 [shape = 's32[1]{0}', space=sflag, size = 0x4, scoped, tag = 'scoped memory for tpu_custom_call.1']
    %20 = vsyncpa [#allocation6], 0
    %s21 = scalar_lea.sflag [#allocation6], 1
    %22 = vsyncpa %s21, 0
    %23 = vsyncpa [#allocation8], 0
    %24 = vsyncpa [#allocation11], 0
    loop: start=0, step=1, limit=14
    $region2: #{tpu_custom_call.1} parent=1 // loop_pre_header
      _
    $region3: #{tpu_custom_call.1} parent=1 // loop_header
      %s26 = sphi 0, %s30
      %p27 = scmp.ge.s32.totalorder %s26, 14
      %s33 = sphi 0, %s52
      %s34 = sphi 0, %s48
      %s35 = sphi 0, %s44
      %s36 = sphi 0, %s33
      %s37 = sphi 0, %s34
      %s38 = sphi 0, %s35
      %s39 = sphi 0, %s36
      %s40 = sphi 0, %s37
      %s41 = sphi 0, %s38
      %s59 = sphi 0, %s61
      %s62 = sphi 0, %s59
      %s63 = sphi 0, %s62
      %s79 = sphi 0, %s63
      %s89 = sphi 0, %s91
      %s92 = sphi 0, %s89
      %s93 = sphi 0, %s92
      %s109 = sphi 0, %s93
      %s119 = sphi 0, %s121
      %s122 = sphi 0, %s119
      %s123 = sphi 0, %s122
      %s139 = sphi 0, %s123
      %s143 = sphi 0, %s143
      %s145 = sphi 0, %s143
      %s146 = sphi 0, %s145
      %s160 = sphi 0, %s146
      %s164 = sphi 0, %s164
      %s166 = sphi 0, %s164
      %s167 = sphi 0, %s166
      %s181 = sphi 0, %s167
      %s185 = sphi 0, %s185
      %s187 = sphi 0, %s185
      %s188 = sphi 0, %s187
      %s202 = sphi 0, %s188
      %s206 = sphi 0, %s206
      %s208 = sphi 0, %s206
      %s209 = sphi 0, %s208
      %s223 = sphi 0, %s209
      %s227 = sphi 0, %s227
      %s229 = sphi 0, %s227
      %s230 = sphi 0, %s229
      %s244 = sphi 0, %s230
      %s248 = sphi 0, %s248
      %s250 = sphi 0, %s248
      %s251 = sphi 0, %s250
      %s265 = sphi 0, %s251
      %s269 = sphi 0, %s269
      %s271 = sphi 0, %s269
      %s272 = sphi 0, %s271
      %s286 = sphi 0, %s272
      %s290 = sphi 0, %s290
      %s292 = sphi 0, %s290
      %s293 = sphi 0, %s292
      %s307 = sphi 0, %s293
      %s311 = sphi 0, %s311
      %s313 = sphi 0, %s311
      %s314 = sphi 0, %s313
      %s328 = sphi 0, %s314
      %s332 = sphi 0, %s332
      %s334 = sphi 0, %s332
      %s335 = sphi 0, %s334
      %s349 = sphi 0, %s335
      %s353 = sphi 0, %s353
      %s355 = sphi 0, %s353
      %s356 = sphi 0, %s355
      %s370 = sphi 0, %s356
      %s374 = sphi 0, %s374
      %s376 = sphi 0, %s374
      %s377 = sphi 0, %s376
      %s391 = sphi 0, %s377
      %s397 = sphi 0, %s399
      %s400 = sphi 0, %s397
      %s401 = sphi 0, %s400
      %s417 = sphi 0, %s401
    $region4: #{tpu_custom_call.1} parent=1 // loop_header_branch
      %29 = sbr.rel (%p27) target = $region8
    $region5: #{tpu_custom_call.1} parent=1 // loop_body
      %s31 = ssub.s32 %s26, 1
      %s32 = ssub.s32 %s26, 2
      %s42 = sadd.s32 1, %s35
      %p43 = scmp.ge.s32.totalorder %s42, 1
      %s44 = scalar_select %p43, 0, %s42
      %s45 = sadd.s32 1, %s34
      %s46 = scalar_select %p43, %s45, %s34
      %p47 = scmp.ge.s32.totalorder %s46, 6
      %s48 = scalar_select %p47, 0, %s46
      %s49 = sadd.s32 1, %s33
      %s50 = scalar_select %p47, %s49, %s33
      %p51 = scmp.ge.s32.totalorder %s50, 2
      %s52 = scalar_select %p51, 0, %s50
      %s53 = ssub.s32 %s33, %s52
      %s54 = ssub.s32 %s34, %s48
      %s55 = sor.u32 %s53, %s54
      %s56 = ssub.s32 %s35, %s44
      %s57 = sor.u32 %s55, %s56
      %p58 = scmp.eq.s32.totalorder %s57, 0
      %s60 = sadd.s32 %s59, 1
      %s61 = scalar_select %p58, %s59, %s60
      %p64 = pneg %p58
      %p65 = scmp.eq.s32.totalorder %s26, 11
      %p66 = por %p64, %p65
      %p67 = scmp.ne.s32.totalorder %s59, %s62
      %p68 = scmp.eq.s32.totalorder %s26, 0
      %p69 = por %p67, %p68
      %p70 = scmp.ne.s32.totalorder %s59, %s62
      %p71 = scmp.eq.s32.totalorder %s31, 11
      %p72 = por %p70, %p71
      %p73 = scmp.ne.s32.totalorder %s62, %s63
      %p74 = scmp.eq.s32.totalorder %s31, 0
      %p75 = por %p73, %p74
      %p76 = scmp.ne.s32.totalorder %s62, %s63
      %p77 = scmp.eq.s32.totalorder %s32, 11
      %p78 = por %p76, %p77
      %p80 = scmp.ne.s32.totalorder %s63, %s79
      %p81 = scmp.eq.s32.totalorder %s32, 0
      %p82 = por %p80, %p81
      %s83 = ssub.s32 %s33, %s52
      %s84 = ssub.s32 %s34, %s48
      %s85 = sor.u32 %s83, %s84
      %s86 = ssub.s32 %s35, %s44
      %s87 = sor.u32 %s85, %s86
      %p88 = scmp.eq.s32.totalorder %s87, 0
      %s90 = sadd.s32 %s89, 1
      %s91 = scalar_select %p88, %s89, %s90
      %p94 = pneg %p88
      %p95 = scmp.eq.s32.totalorder %s26, 11
      %p96 = por %p94, %p95
      %p97 = scmp.ne.s32.totalorder %s89, %s92
      %p98 = scmp.eq.s32.totalorder %s26, 0
      %p99 = por %p97, %p98
      %p100 = scmp.ne.s32.totalorder %s89, %s92
      %p101 = scmp.eq.s32.totalorder %s31, 11
      %p102 = por %p100, %p101
      %p103 = scmp.ne.s32.totalorder %s92, %s93
      %p104 = scmp.eq.s32.totalorder %s31, 0
      %p105 = por %p103, %p104
      %p106 = scmp.ne.s32.totalorder %s92, %s93
      %p107 = scmp.eq.s32.totalorder %s32, 11
      %p108 = por %p106, %p107
      %p110 = scmp.ne.s32.totalorder %s93, %s109
      %p111 = scmp.eq.s32.totalorder %s32, 0
      %p112 = por %p110, %p111
      %s113 = ssub.s32 %s33, %s52
      %s114 = ssub.s32 %s34, %s48
      %s115 = sor.u32 %s113, %s114
      %s116 = ssub.s32 %s35, %s44
      %s117 = sor.u32 %s115, %s116
      %p118 = scmp.eq.s32.totalorder %s117, 0
      %s120 = sadd.s32 %s119, 1
      %s121 = scalar_select %p118, %s119, %s120
      %p124 = pneg %p118
      %p125 = scmp.eq.s32.totalorder %s26, 11
      %p126 = por %p124, %p125
      %p127 = scmp.ne.s32.totalorder %s119, %s122
      %p128 = scmp.eq.s32.totalorder %s26, 0
      %p129 = por %p127, %p128
      %p130 = scmp.ne.s32.totalorder %s119, %s122
      %p131 = scmp.eq.s32.totalorder %s31, 11
      %p132 = por %p130, %p131
      %p133 = scmp.ne.s32.totalorder %s122, %s123
      %p134 = scmp.eq.s32.totalorder %s31, 0
      %p135 = por %p133, %p134
      %p136 = scmp.ne.s32.totalorder %s122, %s123
      %p137 = scmp.eq.s32.totalorder %s32, 11
      %p138 = por %p136, %p137
      %p140 = scmp.ne.s32.totalorder %s123, %s139
      %p141 = scmp.eq.s32.totalorder %s32, 0
      %p142 = por %p140, %p141
      %s144 = sadd.s32 %s143, 1
      %p147 = scmp.eq.s32.totalorder %s26, 11
      %p148 = scmp.ne.s32.totalorder %s143, %s145
      %p149 = scmp.eq.s32.totalorder %s26, 0
      %p150 = por %p148, %p149
      %p151 = scmp.ne.s32.totalorder %s143, %s145
      %p152 = scmp.eq.s32.totalorder %s31, 11
      %p153 = por %p151, %p152
      %p154 = scmp.ne.s32.totalorder %s145, %s146
      %p155 = scmp.eq.s32.totalorder %s31, 0
      %p156 = por %p154, %p155
      %p157 = scmp.ne.s32.totalorder %s145, %s146
      %p158 = scmp.eq.s32.totalorder %s32, 11
      %p159 = por %p157, %p158
      %p161 = scmp.ne.s32.totalorder %s146, %s160
      %p162 = scmp.eq.s32.totalorder %s32, 0
      %p163 = por %p161, %p162
      %s165 = sadd.s32 %s164, 1
      %p168 = scmp.eq.s32.totalorder %s26, 11
      %p169 = scmp.ne.s32.totalorder %s164, %s166
      %p170 = scmp.eq.s32.totalorder %s26, 0
      %p171 = por %p169, %p170
      %p172 = scmp.ne.s32.totalorder %s164, %s166
      %p173 = scmp.eq.s32.totalorder %s31, 11
      %p174 = por %p172, %p173
      %p175 = scmp.ne.s32.totalorder %s166, %s167
      %p176 = scmp.eq.s32.totalorder %s31, 0
      %p177 = por %p175, %p176
      %p178 = scmp.ne.s32.totalorder %s166, %s167
      %p179 = scmp.eq.s32.totalorder %s32, 11
      %p180 = por %p178, %p179
      %p182 = scmp.ne.s32.totalorder %s167, %s181
      %p183 = scmp.eq.s32.totalorder %s32, 0
      %p184 = por %p182, %p183
      %s186 = sadd.s32 %s185, 1
      %p189 = scmp.eq.s32.totalorder %s26, 11
      %p190 = scmp.ne.s32.totalorder %s185, %s187
      %p191 = scmp.eq.s32.totalorder %s26, 0
      %p192 = por %p190, %p191
      %p193 = scmp.ne.s32.totalorder %s185, %s187
      %p194 = scmp.eq.s32.totalorder %s31, 11
      %p195 = por %p193, %p194
      %p196 = scmp.ne.s32.totalorder %s187, %s188
      %p197 = scmp.eq.s32.totalorder %s31, 0
      %p198 = por %p196, %p197
      %p199 = scmp.ne.s32.totalorder %s187, %s188
      %p200 = scmp.eq.s32.totalorder %s32, 11
      %p201 = por %p199, %p200
      %p203 = scmp.ne.s32.totalorder %s188, %s202
      %p204 = scmp.eq.s32.totalorder %s32, 0
      %p205 = por %p203, %p204
      %s207 = sadd.s32 %s206, 1
      %p210 = scmp.eq.s32.totalorder %s26, 11
      %p211 = scmp.ne.s32.totalorder %s206, %s208
      %p212 = scmp.eq.s32.totalorder %s26, 0
      %p213 = por %p211, %p212
      %p214 = scmp.ne.s32.totalorder %s206, %s208
      %p215 = scmp.eq.s32.totalorder %s31, 11
      %p216 = por %p214, %p215
      %p217 = scmp.ne.s32.totalorder %s208, %s209
      %p218 = scmp.eq.s32.totalorder %s31, 0
      %p219 = por %p217, %p218
      %p220 = scmp.ne.s32.totalorder %s208, %s209
      %p221 = scmp.eq.s32.totalorder %s32, 11
      %p222 = por %p220, %p221
      %p224 = scmp.ne.s32.totalorder %s209, %s223
      %p225 = scmp.eq.s32.totalorder %s32, 0
      %p226 = por %p224, %p225
      %s228 = sadd.s32 %s227, 1
      %p231 = scmp.eq.s32.totalorder %s26, 11
      %p232 = scmp.ne.s32.totalorder %s227, %s229
      %p233 = scmp.eq.s32.totalorder %s26, 0
      %p234 = por %p232, %p233
      %p235 = scmp.ne.s32.totalorder %s227, %s229
      %p236 = scmp.eq.s32.totalorder %s31, 11
      %p237 = por %p235, %p236
      %p238 = scmp.ne.s32.totalorder %s229, %s230
      %p239 = scmp.eq.s32.totalorder %s31, 0
      %p240 = por %p238, %p239
      %p241 = scmp.ne.s32.totalorder %s229, %s230
      %p242 = scmp.eq.s32.totalorder %s32, 11
      %p243 = por %p241, %p242
      %p245 = scmp.ne.s32.totalorder %s230, %s244
      %p246 = scmp.eq.s32.totalorder %s32, 0
      %p247 = por %p245, %p246
      %s249 = sadd.s32 %s248, 1
      %p252 = scmp.eq.s32.totalorder %s26, 11
      %p253 = scmp.ne.s32.totalorder %s248, %s250
      %p254 = scmp.eq.s32.totalorder %s26, 0
      %p255 = por %p253, %p254
      %p256 = scmp.ne.s32.totalorder %s248, %s250
      %p257 = scmp.eq.s32.totalorder %s31, 11
      %p258 = por %p256, %p257
      %p259 = scmp.ne.s32.totalorder %s250, %s251
      %p260 = scmp.eq.s32.totalorder %s31, 0
      %p261 = por %p259, %p260
      %p262 = scmp.ne.s32.totalorder %s250, %s251
      %p263 = scmp.eq.s32.totalorder %s32, 11
      %p264 = por %p262, %p263
      %p266 = scmp.ne.s32.totalorder %s251, %s265
      %p267 = scmp.eq.s32.totalorder %s32, 0
      %p268 = por %p266, %p267
      %s270 = sadd.s32 %s269, 1
      %p273 = scmp.eq.s32.totalorder %s26, 11
      %p274 = scmp.ne.s32.totalorder %s269, %s271
      %p275 = scmp.eq.s32.totalorder %s26, 0
      %p276 = por %p274, %p275
      %p277 = scmp.ne.s32.totalorder %s269, %s271
      %p278 = scmp.eq.s32.totalorder %s31, 11
      %p279 = por %p277, %p278
      %p280 = scmp.ne.s32.totalorder %s271, %s272
      %p281 = scmp.eq.s32.totalorder %s31, 0
      %p282 = por %p280, %p281
      %p283 = scmp.ne.s32.totalorder %s271, %s272
      %p284 = scmp.eq.s32.totalorder %s32, 11
      %p285 = por %p283, %p284
      %p287 = scmp.ne.s32.totalorder %s272, %s286
      %p288 = scmp.eq.s32.totalorder %s32, 0
      %p289 = por %p287, %p288
      %s291 = sadd.s32 %s290, 1
      %p294 = scmp.eq.s32.totalorder %s26, 11
      %p295 = scmp.ne.s32.totalorder %s290, %s292
      %p296 = scmp.eq.s32.totalorder %s26, 0
      %p297 = por %p295, %p296
      %p298 = scmp.ne.s32.totalorder %s290, %s292
      %p299 = scmp.eq.s32.totalorder %s31, 11
      %p300 = por %p298, %p299
      %p301 = scmp.ne.s32.totalorder %s292, %s293
      %p302 = scmp.eq.s32.totalorder %s31, 0
      %p303 = por %p301, %p302
      %p304 = scmp.ne.s32.totalorder %s292, %s293
      %p305 = scmp.eq.s32.totalorder %s32, 11
      %p306 = por %p304, %p305
      %p308 = scmp.ne.s32.totalorder %s293, %s307
      %p309 = scmp.eq.s32.totalorder %s32, 0
      %p310 = por %p308, %p309
      %s312 = sadd.s32 %s311, 1
      %p315 = scmp.eq.s32.totalorder %s26, 11
      %p316 = scmp.ne.s32.totalorder %s311, %s313
      %p317 = scmp.eq.s32.totalorder %s26, 0
      %p318 = por %p316, %p317
      %p319 = scmp.ne.s32.totalorder %s311, %s313
      %p320 = scmp.eq.s32.totalorder %s31, 11
      %p321 = por %p319, %p320
      %p322 = scmp.ne.s32.totalorder %s313, %s314
      %p323 = scmp.eq.s32.totalorder %s31, 0
      %p324 = por %p322, %p323
      %p325 = scmp.ne.s32.totalorder %s313, %s314
      %p326 = scmp.eq.s32.totalorder %s32, 11
      %p327 = por %p325, %p326
      %p329 = scmp.ne.s32.totalorder %s314, %s328
      %p330 = scmp.eq.s32.totalorder %s32, 0
      %p331 = por %p329, %p330
      %s333 = sadd.s32 %s332, 1
      %p336 = scmp.eq.s32.totalorder %s26, 11
      %p337 = scmp.ne.s32.totalorder %s332, %s334
      %p338 = scmp.eq.s32.totalorder %s26, 0
      %p339 = por %p337, %p338
      %p340 = scmp.ne.s32.totalorder %s332, %s334
      %p341 = scmp.eq.s32.totalorder %s31, 11
      %p342 = por %p340, %p341
      %p343 = scmp.ne.s32.totalorder %s334, %s335
      %p344 = scmp.eq.s32.totalorder %s31, 0
      %p345 = por %p343, %p344
      %p346 = scmp.ne.s32.totalorder %s334, %s335
      %p347 = scmp.eq.s32.totalorder %s32, 11
      %p348 = por %p346, %p347
      %p350 = scmp.ne.s32.totalorder %s335, %s349
      %p351 = scmp.eq.s32.totalorder %s32, 0
      %p352 = por %p350, %p351
      %s354 = sadd.s32 %s353, 1
      %p357 = scmp.eq.s32.totalorder %s26, 11
      %p358 = scmp.ne.s32.totalorder %s353, %s355
      %p359 = scmp.eq.s32.totalorder %s26, 0
      %p360 = por %p358, %p359
      %p361 = scmp.ne.s32.totalorder %s353, %s355
      %p362 = scmp.eq.s32.totalorder %s31, 11
      %p363 = por %p361, %p362
      %p364 = scmp.ne.s32.totalorder %s355, %s356
      %p365 = scmp.eq.s32.totalorder %s31, 0
      %p366 = por %p364, %p365
      %p367 = scmp.ne.s32.totalorder %s355, %s356
      %p368 = scmp.eq.s32.totalorder %s32, 11
      %p369 = por %p367, %p368
      %p371 = scmp.ne.s32.totalorder %s356, %s370
      %p372 = scmp.eq.s32.totalorder %s32, 0
      %p373 = por %p371, %p372
      %s375 = sadd.s32 %s374, 1
      %p378 = scmp.eq.s32.totalorder %s26, 11
      %p379 = scmp.ne.s32.totalorder %s374, %s376
      %p380 = scmp.eq.s32.totalorder %s26, 0
      %p381 = por %p379, %p380
      %p382 = scmp.ne.s32.totalorder %s374, %s376
      %p383 = scmp.eq.s32.totalorder %s31, 11
      %p384 = por %p382, %p383
      %p385 = scmp.ne.s32.totalorder %s376, %s377
      %p386 = scmp.eq.s32.totalorder %s31, 0
      %p387 = por %p385, %p386
      %p388 = scmp.ne.s32.totalorder %s376, %s377
      %p389 = scmp.eq.s32.totalorder %s32, 11
      %p390 = por %p388, %p389
      %p392 = scmp.ne.s32.totalorder %s377, %s391
      %p393 = scmp.eq.s32.totalorder %s32, 0
      %p394 = por %p392, %p393
      %s395 = ssub.s32 %s33, %s52
      %p396 = scmp.eq.s32.totalorder %s395, 0
      %s398 = sadd.s32 %s397, 1
      %s399 = scalar_select %p396, %s397, %s398
      %p402 = pneg %p396
      %p403 = scmp.eq.s32.totalorder %s26, 11
      %p404 = por %p402, %p403
      %p405 = scmp.ne.s32.totalorder %s397, %s400
      %p406 = scmp.eq.s32.totalorder %s26, 0
      %p407 = por %p405, %p406
      %p408 = scmp.ne.s32.totalorder %s397, %s400
      %p409 = scmp.eq.s32.totalorder %s31, 11
      %p410 = por %p408, %p409
      %p411 = scmp.ne.s32.totalorder %s400, %s401
      %p412 = scmp.eq.s32.totalorder %s31, 0
      %p413 = por %p411, %p412
      %p414 = scmp.ne.s32.totalorder %s400, %s401
      %p415 = scmp.eq.s32.totalorder %s32, 11
      %p416 = por %p414, %p415
      %p418 = scmp.ne.s32.totalorder %s401, %s417
      %p419 = scmp.eq.s32.totalorder %s32, 0
      %p420 = por %p418, %p419
      %p421 = scmp.le.s32.totalorder 1, %s26
      %p422 = scmp.lt.s32.totalorder %s26, 13
      %p423 = pnand %p421, %p422
      %p424 = pneg %p423
      // Predicated region
      $region9: #{tpu_custom_call.1} parent=5 // pred_check
        _
      $region10: #{tpu_custom_call.1} parent=5 // pred_check_branch
        %426 = sbr.rel (%p423) target = $region12
      $region11: #{tpu_custom_call.1} parent=5 // pred_region
        %s427 = ssub.s32 %s26, 1
        // Predicated region
        $region13: #{tpu_custom_call.1} parent=11 // pred_check
          %p428 = pneg %p156
        $region14: #{tpu_custom_call.1} parent=11 // pred_check_branch
          %430 = sbr.rel (%p428) target = $region16
        $region15: #{tpu_custom_call.1} parent=11 // pred_region
          %432 = vsyncadd [#allocation8], 0
          %s434 = sshll.u32 %s3, 4
          %s435 = int_to_ptr.hbm [resolvable:$true] %s434
          %s436 = sshll.u32 [#allocation7], 4
          %s437 = int_to_ptr.vmem [resolvable:$true] %s436
          %439 = dma.hbm_to_vmem [thread:$0]  %s435, 128, %s437, [#allocation8]
        $region16: #{tpu_custom_call.1} parent=11 // pred_fallthru
          _
        // Predicated region
        $region17: #{tpu_custom_call.1} parent=11 // pred_check
          %p440 = pneg %p177
        $region18: #{tpu_custom_call.1} parent=11 // pred_check_branch
          %442 = sbr.rel (%p440) target = $region20
        $region19: #{tpu_custom_call.1} parent=11 // pred_region
          %444 = vsyncadd [#allocation8], 0
          %s446 = sshll.u32 %s4, 4
          %s447 = int_to_ptr.hbm [resolvable:$true] %s446
          %s448 = sshll.u32 [#allocation9], 4
          %s449 = int_to_ptr.vmem [resolvable:$true] %s448
          %451 = dma.hbm_to_vmem [thread:$0]  %s447, 64, %s449, [#allocation8]
        $region20: #{tpu_custom_call.1} parent=11 // pred_fallthru
          _
        // Predicated region
        $region21: #{tpu_custom_call.1} parent=11 // pred_check
          %p452 = pneg %p198
        $region22: #{tpu_custom_call.1} parent=11 // pred_check_branch
          %454 = sbr.rel (%p452) target = $region24
        $region23: #{tpu_custom_call.1} parent=11 // pred_region
          _
        $region24: #{tpu_custom_call.1} parent=11 // pred_fallthru
          _
        // Predicated region
        $region25: #{tpu_custom_call.1} parent=11 // pred_check
          %p455 = pneg %p219
        $region26: #{tpu_custom_call.1} parent=11 // pred_check_branch
          %457 = sbr.rel (%p455) target = $region28
        $region27: #{tpu_custom_call.1} parent=11 // pred_region
          _
        $region28: #{tpu_custom_call.1} parent=11 // pred_fallthru
          _
        // Predicated region
        $region29: #{tpu_custom_call.1} parent=11 // pred_check
          %p458 = pneg %p240
        $region30: #{tpu_custom_call.1} parent=11 // pred_check_branch
          %460 = sbr.rel (%p458) target = $region32
        $region31: #{tpu_custom_call.1} parent=11 // pred_region
          _
        $region32: #{tpu_custom_call.1} parent=11 // pred_fallthru
          _
        // Predicated region
        $region33: #{tpu_custom_call.1} parent=11 // pred_check
          %p461 = pneg %p261
        $region34: #{tpu_custom_call.1} parent=11 // pred_check_branch
          %463 = sbr.rel (%p461) target = $region36
        $region35: #{tpu_custom_call.1} parent=11 // pred_region
          _
        $region36: #{tpu_custom_call.1} parent=11 // pred_fallthru
          _
        // Predicated region
        $region37: #{tpu_custom_call.1} parent=11 // pred_check
          %p464 = pneg %p282
        $region38: #{tpu_custom_call.1} parent=11 // pred_check_branch
          %466 = sbr.rel (%p464) target = $region40
        $region39: #{tpu_custom_call.1} parent=11 // pred_region
          _
        $region40: #{tpu_custom_call.1} parent=11 // pred_fallthru
          _
        // Predicated region
        $region41: #{tpu_custom_call.1} parent=11 // pred_check
          %p467 = pneg %p303
        $region42: #{tpu_custom_call.1} parent=11 // pred_check_branch
          %469 = sbr.rel (%p467) target = $region44
        $region43: #{tpu_custom_call.1} parent=11 // pred_region
          _
        $region44: #{tpu_custom_call.1} parent=11 // pred_fallthru
          _
        // Predicated region
        $region45: #{tpu_custom_call.1} parent=11 // pred_check
          %p470 = pneg %p324
        $region46: #{tpu_custom_call.1} parent=11 // pred_check_branch
          %472 = sbr.rel (%p470) target = $region48
        $region47: #{tpu_custom_call.1} parent=11 // pred_region
          _
        $region48: #{tpu_custom_call.1} parent=11 // pred_fallthru
          _
        // Predicated region
        $region49: #{tpu_custom_call.1} parent=11 // pred_check
          %p473 = pneg %p345
        $region50: #{tpu_custom_call.1} parent=11 // pred_check_branch
          %475 = sbr.rel (%p473) target = $region52
        $region51: #{tpu_custom_call.1} parent=11 // pred_region
          _
        $region52: #{tpu_custom_call.1} parent=11 // pred_fallthru
          _
        // Predicated region
        $region53: #{tpu_custom_call.1} parent=11 // pred_check
          %p476 = pneg %p366
        $region54: #{tpu_custom_call.1} parent=11 // pred_check_branch
          %478 = sbr.rel (%p476) target = $region56
        $region55: #{tpu_custom_call.1} parent=11 // pred_region
          %480 = vsyncadd [#allocation11], 0
          %s481 = sshll.u32 %s13, 4
          %s482 = int_to_ptr.hbm [resolvable:$true] %s481
          %s483 = sshll.u32 [#allocation10], 4
          %s484 = int_to_ptr.vmem [resolvable:$true] %s483
          %489 = dma.hbm_to_vmem [thread:$0]  %s482, 256, %s484, [#allocation11], 64, 64, 4
        $region56: #{tpu_custom_call.1} parent=11 // pred_fallthru
          _
        // Predicated region
        $region57: #{tpu_custom_call.1} parent=11 // pred_check
          %p490 = pneg %p387
        $region58: #{tpu_custom_call.1} parent=11 // pred_check_branch
          %492 = sbr.rel (%p490) target = $region60
        $region59: #{tpu_custom_call.1} parent=11 // pred_region
          _
        $region60: #{tpu_custom_call.1} parent=11 // pred_fallthru
          _
      $region12: #{tpu_custom_call.1} parent=5 // pred_fallthru
        _
      %p493 = scmp.lt.s32.totalorder %s26, 12
      // Predicated region
      $region61: #{tpu_custom_call.1} parent=5 // pred_check
        %p494 = pneg %p493
      $region62: #{tpu_custom_call.1} parent=5 // pred_check_branch
        %496 = sbr.rel (%p494) target = $region64
      $region63: #{tpu_custom_call.1} parent=5 // pred_region
        // Predicated region
        $region65: #{tpu_custom_call.1} parent=63 // pred_check
          %p497 = pneg %p69
        $region66: #{tpu_custom_call.1} parent=63 // pred_check_branch
          %499 = sbr.rel (%p497) target = $region68
        $region67: #{tpu_custom_call.1} parent=63 // pred_region
          %p500 = scmp.lt.s32.totalorder %s33, 1
          %s501 = scalar_select %p500, %s33, 1
          %p502 = scmp.lt.s32.totalorder %s34, 5
          %s503 = scalar_select %p502, %s34, 5
          %p504 = scmp.lt.s32.totalorder %s35, 0
          %s505 = scalar_select %p504, %s35, 0
          %s506 = sadd.s32 %s505, %s503
          %s507 = smul.addr %s501, 6
          %s508 = sadd.s32 %s506, %s507
          %s509 = smul.addr %s508, 2
          %s510 = scalar_lea.vmem %s0, %s509
        $region68: #{tpu_custom_call.1} parent=63 // pred_fallthru
          _
        // Predicated region
        $region69: #{tpu_custom_call.1} parent=63 // pred_check
          %p511 = pneg %p99
        $region70: #{tpu_custom_call.1} parent=63 // pred_check_branch
          %513 = sbr.rel (%p511) target = $region72
        $region71: #{tpu_custom_call.1} parent=63 // pred_region
          %s514 = sand.u32 %s89, 1
          %s515 = scalar_lea.sflag [#allocation6], %s514
          %s516 = sand.u32 %s89, 1
          %s517 = smul.addr %s516, 16
          %s518 = scalar_lea.vmem [#allocation5], %s517
          %520 = vsyncadd %s515, 0
          %s521 = smul.addr %s34, 4
          %s522 = sadd.s32 %s35, %s521
          %s523 = smul.addr %s33, 24
          %s524 = sadd.s32 %s522, %s523
          %s525 = smul.addr %s524, 4
          %s526 = scalar_lea.hbm %s1, %s525
          %s527 = sshll.u32 %s526, 4
          %s528 = int_to_ptr.hbm [resolvable:$true] %s527
          %s529 = sshll.u32 %s518, 4
          %s530 = int_to_ptr.vmem [resolvable:$true] %s529
          %535 = dma.hbm_to_vmem [thread:$0]  %s528, 256, %s530, %s515, 64, 64, 4
        $region72: #{tpu_custom_call.1} parent=63 // pred_fallthru
          _
        // Predicated region
        $region73: #{tpu_custom_call.1} parent=63 // pred_check
          %p536 = pneg %p129
        $region74: #{tpu_custom_call.1} parent=63 // pred_check_branch
          %538 = sbr.rel (%p536) target = $region76
        $region75: #{tpu_custom_call.1} parent=63 // pred_region
          %p539 = scmp.lt.s32.totalorder %s33, 1
          %s540 = scalar_select %p539, %s33, 1
          %p541 = scmp.lt.s32.totalorder %s34, 5
          %s542 = scalar_select %p541, %s34, 5
          %p543 = scmp.lt.s32.totalorder %s35, 0
          %s544 = scalar_select %p543, %s35, 0
          %s545 = sadd.s32 %s544, %s542
          %s546 = smul.addr %s540, 6
          %s547 = sadd.s32 %s545, %s546
          %s548 = scalar_lea.vmem %s2, %s547
        $region76: #{tpu_custom_call.1} parent=63 // pred_fallthru
          _
      $region64: #{tpu_custom_call.1} parent=5 // pred_fallthru
        _
      %p549 = scmp.le.s32.totalorder 1, %s26
      %p550 = scmp.lt.s32.totalorder %s26, 13
      %p551 = pnand %p549, %p550
      %p552 = pneg %p551
      // Predicated region
      $region77: #{tpu_custom_call.1} parent=5 // pred_check
        _
      $region78: #{tpu_custom_call.1} parent=5 // pred_check_branch
        %554 = sbr.rel (%p551) target = $region80
      $region79: #{tpu_custom_call.1} parent=5 // pred_region
        %s555 = ssub.s32 %s26, 1
        %s556 = sand.u32 %s92, 1
        %s557 = scalar_lea.sflag [#allocation6], %s556
        %s558 = sand.u32 %s92, 1
        %s559 = smul.addr %s558, 16
        %s560 = scalar_lea.vmem [#allocation5], %s559
        // Predicated region
        $region81: #{tpu_custom_call.1} parent=79 // pred_check
          %p561 = pneg %p105
        $region82: #{tpu_custom_call.1} parent=79 // pred_check_branch
          %563 = sbr.rel (%p561) target = $region84
        $region83: #{tpu_custom_call.1} parent=79 // pred_region
          %565 = dma.done %s557, 256
        $region84: #{tpu_custom_call.1} parent=79 // pred_fallthru
          _
        // Predicated region
        $region85: #{tpu_custom_call.1} parent=79 // pred_check
          %p566 = pneg %p156
        $region86: #{tpu_custom_call.1} parent=79 // pred_check_branch
          %568 = sbr.rel (%p566) target = $region88
        $region87: #{tpu_custom_call.1} parent=79 // pred_region
          %570 = dma.done [#allocation8], 128
        $region88: #{tpu_custom_call.1} parent=79 // pred_fallthru
          _
        // Predicated region
        $region89: #{tpu_custom_call.1} parent=79 // pred_check
          %p571 = pneg %p177
        $region90: #{tpu_custom_call.1} parent=79 // pred_check_branch
          %573 = sbr.rel (%p571) target = $region92
        $region91: #{tpu_custom_call.1} parent=79 // pred_region
          %575 = dma.done [#allocation8], 64
        $region92: #{tpu_custom_call.1} parent=79 // pred_fallthru
          _
        // Predicated region
        $region93: #{tpu_custom_call.1} parent=79 // pred_check
          %p576 = pneg %p366
        $region94: #{tpu_custom_call.1} parent=79 // pred_check_branch
          %578 = sbr.rel (%p576) target = $region96
        $region95: #{tpu_custom_call.1} parent=79 // pred_region
          %580 = dma.done [#allocation11], 256
        $region96: #{tpu_custom_call.1} parent=79 // pred_fallthru
          _
        %p581 = scmp.lt.s32.totalorder %s36, 1
        %s582 = scalar_select %p581, %s36, 1
        %p583 = scmp.lt.s32.totalorder %s37, 5
        %s584 = scalar_select %p583, %s37, 5
        %p585 = scmp.lt.s32.totalorder %s38, 0
        %s586 = scalar_select %p585, %s38, 0
        %s587 = sadd.s32 %s586, %s584
        %s588 = smul.addr %s582, 6
        %s589 = sadd.s32 %s587, %s588
        %s590 = smul.addr %s589, 2
        %s591 = scalar_lea.vmem %s0, %s590
        %p592 = pneg %p75
        %p593 = pneg %p72
        %s594 = sand.u32 %s92, 1
        %s595 = scalar_lea.sflag [#allocation6], %s594
        %s596 = sand.u32 %s92, 1
        %s597 = smul.addr %s596, 16
        %s598 = scalar_lea.vmem [#allocation5], %s597
        %p599 = pneg %p105
        %p600 = pneg %p102
        %p601 = scmp.lt.s32.totalorder %s36, 1
        %s602 = scalar_select %p601, %s36, 1
        %p603 = scmp.lt.s32.totalorder %s37, 5
        %s604 = scalar_select %p603, %s37, 5
        %p605 = scmp.lt.s32.totalorder %s38, 0
        %s606 = scalar_select %p605, %s38, 0
        %s607 = sadd.s32 %s606, %s604
        %s608 = smul.addr %s602, 6
        %s609 = sadd.s32 %s607, %s608
        %s610 = scalar_lea.vmem %s2, %s609
        %p611 = pneg %p135
        %p612 = pneg %p132
        %p613 = pneg %p156
        %p614 = pneg %p153
        %p615 = pneg %p177
        %p616 = pneg %p174
        %p617 = pneg %p198
        %p618 = pneg %p195
        %p619 = pneg %p219
        %p620 = pneg %p216
        %p621 = pneg %p240
        %p622 = pneg %p237
        %p623 = pneg %p261
        %p624 = pneg %p258
        %p625 = pneg %p282
        %p626 = pneg %p279
        %p627 = pneg %p303
        %p628 = pneg %p300
        %p629 = pneg %p324
        %p630 = pneg %p321
        %p631 = pneg %p345
        %p632 = pneg %p342
        %p633 = pneg %p366
        %p634 = pneg %p363
        %p635 = pneg %p387
        %p636 = pneg %p384
        %p637 = pneg %p413
        %p638 = pneg %p410
        %p639 = scmp.lt.s32.totalorder %s36, 1
        %s640 = scalar_select %p639, %s36, 1
        %s641 = smul.addr %s640, 8
        %s642 = scalar_lea.vmem %s15, %s641
        %p643 = scmp.lt.s32.totalorder %s36, 1
        %s644 = scalar_select %p643, %s36, 1
        %p645 = scmp.lt.s32.totalorder %s37, 5
        %s646 = scalar_select %p645, %s37, 5
        %p647 = scmp.lt.s32.totalorder %s38, 0
        %s648 = scalar_select %p647, %s38, 0
        %s649 = sadd.s32 %s648, %s646
        %s650 = smul.addr %s644, 6
        %s651 = sadd.s32 %s649, %s650
        %s652 = smul.addr %s651, 2
        %s653 = scalar_lea.vmem %s0, %s652
        %p654 = scmp.lt.s32.totalorder %s36, 1
        %s655 = scalar_select %p654, %s36, 1
        %p656 = scmp.lt.s32.totalorder %s37, 5
        %s657 = scalar_select %p656, %s37, 5
        %p658 = scmp.lt.s32.totalorder %s38, 0
        %s659 = scalar_select %p658, %s38, 0
        %s660 = sadd.s32 %s659, %s657
        %s661 = smul.addr %s655, 6
        %s662 = sadd.s32 %s660, %s661
        %s663 = scalar_lea.vmem %s2, %s662
        %p664 = scmp.lt.s32.totalorder %s36, 1
        %s665 = scalar_select %p664, %s36, 1
        %s666 = smul.addr %s665, 8
        %s667 = scalar_lea.vmem %s15, %s666
        %p669 = scmp.eq.s32.totalorder %s37, 0
        %p670 = scmp.eq.s32.totalorder %s38, 0
        %p671 = pnand %p669, %p670
        %p672 = pneg %p671
        %p673 = scmp.eq.s32.totalorder %s37, 5
        %p674 = pnand %p673, %p670
        %p675 = pneg %p674
        // Predicated region
        $region97: #{tpu_custom_call.1} parent=79 // pred_check
          _
        $region98: #{tpu_custom_call.1} parent=79 // pred_check_branch
          %677 = sbr.rel (%p671) target = $region100
        $region99: #{tpu_custom_call.1} parent=79 // pred_region
          %vm678 = vcmask 5120
          %679 = vst.msk [vmem:[#allocation2] sm:$0x3f] %vm678, -inf
          %680 = vst.msk [vmem:[#allocation3] sm:$0x3f] %vm678, 0.0
          %vm681 = vcmask 259072
          %682 = vst.msk [vmem:[#allocation4] sm:$0x3f] %vm681, 0.0
        $region100: #{tpu_custom_call.1} parent=79 // pred_fallthru
          _
        %v683 = vld [vmem:[%s653] sm:$0x3]
        %v684 = vld [vmem:[%s560] sm:$0xf]
        %v685 = vld [vmem:[%s560 + $0x4] sm:$0xf]
        %v686 = vld [vmem:[%s560 + $0x8] sm:$0xf]
        %v687 = vld [vmem:[%s560 + $0xc] sm:$0xf]
        %v688 = vld [vmem:[%s663] sm:$0x1]
        %v689 = vlaneseq
        %v690 = vand.u32 %v689, 127
        %s691 = smul.u32 %s38, 64
        %v692 = vstv %s691
        %v693 = vadd.s32 %v690, %v692
        %vm694 = vcmp.lt.s32.totalorder %v693, 64
        %v695 = vunpack.c.l.bf16 %v688
        %vm696 = vcmp.lt.f32.partialorder %v695, 0.5
        %vm697 = vmand %vm694, %vm696
        %v698 = vld [vmem:[%s5] sm:$0xf]
        %v699 = vld [vmem:[%s5 + $0x4] sm:$0xf]
        %v700 = vld [vmem:[%s5 + $0x8] sm:$0xf]
        %v701 = vld [vmem:[%s5 + $0xc] sm:$0xf]
        %v702 = vld [vmem:[%s6] sm:$0xff]
        %v703 = vld [vmem:[%s6 + $0x8] sm:$0xff]
        %v704 = vld [vmem:[%s6 + $0x10] sm:$0xff]
        %v705 = vld [vmem:[%s6 + $0x18] sm:$0xff]
        %707 = vset.pattern.permute.xlu0 0
        %708 = vperm.xlu0 %707, %v702
        %v709 = vpop.permute.xlu0 %708
        %712 = vset.pattern.permute.xlu0 0
        %713 = vperm.xlu0 %712, %v703
        %v714 = vpop.permute.xlu0 %713
        %717 = vset.pattern.permute.xlu0 0
        %718 = vperm.xlu0 %717, %v704
        %v719 = vpop.permute.xlu0 %718
        %722 = vset.pattern.permute.xlu0 0
        %723 = vperm.xlu0 %722, %v705
        %v724 = vpop.permute.xlu0 %723
        %v730 = vunpack.c.l.b16 %v698
        %v731 = vunpack.c.l.b16 %v699
        %v732 = vunpack.c.l.b16 %v700
        %v733 = vunpack.c.l.b16 %v701
        %v734 = vpack.c.b16 %v731, %v730
        %v735 = vpack.c.b16 %v733, %v732
        %vm736 = vcmask 31744
        %v738 = vsel %vm736, %v734, 0
        %v741 = vsel %vm736, %v735, 0
        %vm743 = vcmask 1041408
        %v745 = vsel %vm743, %v683, 0
        %747 = vmatpush.bf16.msra.mxu0 0
        %748 = vmatpush.bf16.msra.mxu0 0
        %749 = vmatpush.bf16.msra.mxu0 0
        %750 = vmatpush.bf16.msra.mxu0 0
        %751 = vmatpush.bf16.msra.mxu0 0
        %752 = vmatpush.bf16.msra.mxu0 0
        %753 = vmatpush.bf16.msra.mxu0 0
        %754 = vmatpush.bf16.msra.mxu0 %v745
        %755 = vmatmul.bf16.gmra.mxu0 %v738
        %v756 = vpop.f32.mrf.mxu0
        %v757 = vadd.f32 %v709, %v756
        %v758 = vpop.f32.mrf.mxu0
        %v759 = vadd.f32 %v714, %v758
        %760 = vmatmul.bf16.gmra.mxu0 %v741
        %v761 = vpop.f32.mrf.mxu0
        %v762 = vadd.f32 %v719, %v761
        %v763 = vpop.f32.mrf.mxu0
        %v764 = vadd.f32 %v724, %v763
        %765 = vdwg.mxu0
        %v766 = vsel %vm697, 1, 0
        %v767 = vperm.slane %v766, 0
        %vm768 = vcmp.eq.s32.totalorder %v767, 1
        %v769 = vsel %vm768, %v757, 0.0
        %v770 = vsel %vm768, %v759, 0.0
        %v771 = vsel %vm768, %v762, 0.0
        %v772 = vsel %vm768, %v764, 0.0
        %v773 = vpack.c.bf16 %v769, %v769
        %v774 = vpack.c.bf16 %v770, %v770
        %v775 = vpack.c.bf16 %v771, %v771
        %v776 = vpack.c.bf16 %v772, %v772
        %vm777 = vmpackc.low %vm768, %vm768
        %v778 = vsel %vm777, %v684, 0
        %v779 = vsel %vm777, %v685, 0
        %v780 = vsel %vm777, %v686, 0
        %v781 = vsel %vm777, %v687, 0
        %v782 = vunpack.c.l.bf16 %v773
        %v783 = vunpack.c.l.bf16 %v774
        %v784 = vunpack.c.l.bf16 %v775
        %v785 = vunpack.c.l.bf16 %v776
        %v786 = vunpack.c.l.bf16 %v778
        %v787 = vunpack.c.l.bf16 %v779
        %v788 = vunpack.c.l.bf16 %v780
        %v789 = vunpack.c.l.bf16 %v781
        %v790 = vadd.f32 %v782, %v786
        %v791 = vadd.f32 %v783, %v787
        %v792 = vadd.f32 %v784, %v788
        %v793 = vadd.f32 %v785, %v789
        %v794 = vpack.c.bf16 %v791, %v790
        %v795 = vpack.c.bf16 %v793, %v792
        %v796 = vld [vmem:[#allocation9] sm:$0x7]
        %vm797 = vcmask 261120
        %v799 = vsel %vm797, %v796, 0
        %801 = vmatpush.bf16.msra.mxu0 0
        %802 = vmatpush.bf16.msra.mxu0 0
        %803 = vmatpush.bf16.msra.mxu0 0
        %804 = vmatpush.bf16.msra.mxu0 0
        %805 = vmatpush.bf16.msra.mxu0 0
        %806 = vmatpush.bf16.msra.mxu0 0
        %807 = vmatpush.bf16.msra.mxu0 %v795
        %808 = vmatpush.bf16.msra.mxu0 %v794
        %809 = vmatmul.bf16.gmra.mxu0 %v799
        %v810 = vpop.f32.mrf.mxu0
        %v811 = vadd.f32 0.0, %v810
        %v812 = vpop.f32.mrf.mxu0
        %813 = vdwg.mxu0
        %v814 = vsel %vm768, %v811, -1e+09
        %v815 = vld [vmem:[#allocation2] sm:$0x3f]
        %vm816 = vcmask 521216
        %v817 = vsel %vm816, %v814, -inf
        %818 = vmax.xlane.f32.xlu0 %v817
        %v819 = vpop.xlane.xlu0 %818
        %v820 = vmax.f32 %v815, %v819
        %v821 = vsub.f32 %v815, %v820
        %v822 = vmul.f32 %v821, 1.442695
        %v823 = vpow.pop %v822
        %825 = vset.pattern.permute.xlu0 0
        %826 = vperm.xlu0 %825, %v820
        %v827 = vpop.permute.xlu0 %826
        %v829 = vsub.f32 %v814, %v827
        %v830 = vmul.f32 %v829, 1.442695
        %v831 = vpow.pop %v830
        %v832 = vld [vmem:[#allocation3] sm:$0x3f]
        %v833 = vmul.f32 %v823, %v832
        %v834 = vsel %vm816, %v831, 0.0
        %835 = vadd.xlane.f32.xlu0 %v834
        %v836 = vpop.xlane.xlu0 %835
        %v837 = vadd.f32 %v833, %v836
        %vm838 = vcmask 5120
        %839 = vst.msk [vmem:[#allocation3] sm:$0x3f] %vm838, %v837
        %v840 = vld [vmem:[#allocation4] sm:$0x3f]
        %842 = vset.pattern.permute.xlu0 0
        %843 = vperm.xlu0 %842, %v823
        %v844 = vpop.permute.xlu0 %843
        %v846 = vmul.f32 %v844, %v840
        %v847 = vpack.c.bf16 %v831, %v831
        %v852 = vunpack.c.l.b16 %v773
        %v853 = vunpack.c.l.b16 %v774
        %v854 = vunpack.c.l.b16 %v775
        %v855 = vunpack.c.l.b16 %v776
        %v856 = vpack.c.b16 %v853, %v852
        %v857 = vpack.c.b16 %v855, %v854
        %vm858 = vcmask 523264
        %v860 = vsel %vm858, %v847, 0
        %v863 = vsel %vm858, %v856, 0
        %v866 = vsel %vm858, %v857, 0
        %868 = vmatpush.bf16.xpose.msra.mxu0 0
        %869 = vmatpush.bf16.xpose.msra.mxu0 0
        %870 = vmatpush.bf16.xpose.msra.mxu0 0
        %871 = vmatpush.bf16.xpose.msra.mxu0 0
        %872 = vmatpush.bf16.xpose.msra.mxu0 0
        %873 = vmatpush.bf16.xpose.msra.mxu0 0
        %874 = vmatpush.bf16.xpose.msra.mxu0 %v866
        %875 = vmatpush.bf16.xpose.msra.mxu0 %v863
        %876 = vmatmul.bf16.gmra.mxu0 %v860
        %v877 = vpop.f32.mrf.mxu0
        %v878 = vadd.f32 0.0, %v877
        %v879 = vpop.f32.mrf.mxu0
        %880 = vdwg.mxu0
        %v881 = vadd.f32 %v846, %v878
        %vm882 = vcmask 259072
        %883 = vst.msk [vmem:[#allocation4] sm:$0x3f] %vm882, %v881
        %884 = vst.msk [vmem:[#allocation2] sm:$0x3f] %vm838, %v820
        // Predicated region
        $region101: #{tpu_custom_call.1} parent=79 // pred_check
          _
        $region102: #{tpu_custom_call.1} parent=79 // pred_check_branch
          %886 = sbr.rel (%p674) target = $region104
        $region103: #{tpu_custom_call.1} parent=79 // pred_region
          %v887 = vld [vmem:[#allocation3] sm:$0x3f]
          %v888 = vrcp.pop %v887
          %v889 = vld [vmem:[#allocation7] sm:$0x3f]
          %v890 = vld [vmem:[#allocation4] sm:$0x3f]
          %892 = vset.pattern.permute.xlu0 0
          %893 = vperm.xlu0 %892, %v888
          %v894 = vpop.permute.xlu0 %893
          %v896 = vmul.f32 %v890, %v894
          %v897 = vadd.f32 %v889, %v896
          %v898 = vpack.c.bf16 %v897, %v897
          %v899 = vld [vmem:[%s11] sm:$0xf]
          %v900 = vld [vmem:[%s11 + $0x4] sm:$0xf]
          %v901 = vld [vmem:[%s11 + $0x8] sm:$0xf]
          %v902 = vld [vmem:[%s11 + $0xc] sm:$0xf]
          %v903 = vld [vmem:[%s12] sm:$0x1]
          %v905 = vperm.slane %v903, 0
          %v911 = vunpack.c.l.b16 %v899
          %v912 = vunpack.c.l.b16 %v900
          %v913 = vunpack.c.l.b16 %v901
          %v914 = vunpack.c.l.b16 %v902
          %v915 = vpack.c.b16 %v912, %v911
          %v916 = vpack.c.b16 %v914, %v913
          %v920 = vsel %vm797, %v898, 0
          %922 = vmatpush.bf16.msra.mxu0 0
          %923 = vmatpush.bf16.msra.mxu0 0
          %924 = vmatpush.bf16.msra.mxu0 0
          %925 = vmatpush.bf16.msra.mxu0 0
          %926 = vmatpush.bf16.msra.mxu0 0
          %927 = vmatpush.bf16.msra.mxu0 0
          %928 = vmatpush.bf16.msra.mxu0 %v916
          %929 = vmatpush.bf16.msra.mxu0 %v915
          %930 = vmatmul.bf16.gmra.mxu0 %v920
          %v931 = vpop.f32.mrf.mxu0
          %v932 = vadd.f32 %v905, %v931
          %v933 = vpop.f32.mrf.mxu0
          %934 = vdwg.mxu0
          %v935 = vld [vmem:[%s7] sm:$0xf]
          %v936 = vld [vmem:[%s7 + $0x4] sm:$0xf]
          %v937 = vld [vmem:[%s7 + $0x8] sm:$0xf]
          %v938 = vld [vmem:[%s7 + $0xc] sm:$0xf]
          %v939 = vld [vmem:[%s8] sm:$0x1]
          %v941 = vperm.slane %v939, 0
          %v947 = vunpack.c.l.b16 %v935
          %v948 = vunpack.c.l.b16 %v936
          %v949 = vunpack.c.l.b16 %v937
          %v950 = vunpack.c.l.b16 %v938
          %v951 = vpack.c.b16 %v948, %v947
          %v952 = vpack.c.b16 %v950, %v949
          %955 = vmatpush.bf16.msra.mxu0 0
          %956 = vmatpush.bf16.msra.mxu0 0
          %957 = vmatpush.bf16.msra.mxu0 0
          %958 = vmatpush.bf16.msra.mxu0 0
          %959 = vmatpush.bf16.msra.mxu0 0
          %960 = vmatpush.bf16.msra.mxu0 0
          %961 = vmatpush.bf16.msra.mxu0 %v952
          %962 = vmatpush.bf16.msra.mxu0 %v951
          %963 = vmatmul.bf16.gmra.mxu0 %v920
          %v964 = vpop.f32.mrf.mxu0
          %v965 = vadd.f32 %v941, %v964
          %v966 = vpop.f32.mrf.mxu0
          %967 = vdwg.mxu0
          %v968 = vmax.f32 %v965, 0.0
          %v969 = vpack.c.bf16 %v968, %v968
          %v970 = vld [vmem:[%s9] sm:$0xf]
          %v971 = vld [vmem:[%s9 + $0x4] sm:$0xf]
          %v972 = vld [vmem:[%s9 + $0x8] sm:$0xf]
          %v973 = vld [vmem:[%s9 + $0xc] sm:$0xf]
          %v974 = vld [vmem:[%s10] sm:$0x1]
          %v976 = vperm.slane %v974, 0
          %v982 = vunpack.c.l.b16 %v970
          %v983 = vunpack.c.l.b16 %v971
          %v984 = vunpack.c.l.b16 %v972
          %v985 = vunpack.c.l.b16 %v973
          %v986 = vpack.c.b16 %v983, %v982
          %v987 = vpack.c.b16 %v985, %v984
          %v991 = vsel %vm797, %v969, 0
          %993 = vmatpush.bf16.msra.mxu0 0
          %994 = vmatpush.bf16.msra.mxu0 0
          %995 = vmatpush.bf16.msra.mxu0 0
          %996 = vmatpush.bf16.msra.mxu0 0
          %997 = vmatpush.bf16.msra.mxu0 0
          %998 = vmatpush.bf16.msra.mxu0 0
          %999 = vmatpush.bf16.msra.mxu0 %v987
          %1000 = vmatpush.bf16.msra.mxu0 %v986
          %1001 = vmatmul.bf16.gmra.mxu0 %v991
          %v1002 = vpop.f32.mrf.mxu0
          %v1003 = vadd.f32 %v976, %v1002
          %v1004 = vpop.f32.mrf.mxu0
          %1005 = vdwg.mxu0
          %v1006 = vmax.f32 %v1003, 0.0
          %v1007 = vpack.c.bf16 %v1006, %v1006
          %v1008 = vld [vmem:[#allocation10] sm:$0xf]
          %v1009 = vld [vmem:[#allocation10 + $0x4] sm:$0xf]
          %v1010 = vld [vmem:[#allocation10 + $0x8] sm:$0xf]
          %v1011 = vld [vmem:[#allocation10 + $0xc] sm:$0xf]
          %v1012 = vld [vmem:[%s14] sm:$0x1]
          %v1014 = vperm.slane %v1012, 0
          %v1020 = vunpack.c.l.b16 %v1008
          %v1021 = vunpack.c.l.b16 %v1009
          %v1022 = vunpack.c.l.b16 %v1010
          %v1023 = vunpack.c.l.b16 %v1011
          %v1024 = vpack.c.b16 %v1021, %v1020
          %v1025 = vpack.c.b16 %v1023, %v1022
          %v1029 = vsel %vm797, %v1007, 0
          %1031 = vmatpush.bf16.msra.mxu0 0
          %1032 = vmatpush.bf16.msra.mxu0 0
          %1033 = vmatpush.bf16.msra.mxu0 0
          %1034 = vmatpush.bf16.msra.mxu0 0
          %1035 = vmatpush.bf16.msra.mxu0 0
          %1036 = vmatpush.bf16.msra.mxu0 0
          %1037 = vmatpush.bf16.msra.mxu0 %v1025
          %1038 = vmatpush.bf16.msra.mxu0 %v1024
          %1039 = vmatmul.bf16.gmra.mxu0 %v1029
          %v1040 = vpop.f32.mrf.mxu0
          %v1041 = vadd.f32 %v1014, %v1040
          %v1042 = vpop.f32.mrf.mxu0
          %1043 = vdwg.mxu0
          %v1044 = vxor.u32 %v1041, 2147483648
          %v1045 = vmul.f32 %v1044, 1.442695
          %v1046 = vpow.pop %v1045
          %v1047 = vadd.f32 %v1046, 1.0
          %v1048 = vrcp.pop %v1047
          %v1049 = vmul.f32 %v1047, %v1048
          %v1050 = vsub.f32 1.0, %v1049
          %v1051 = vmul.f32 %v1048, %v1050
          %v1052 = vadd.f32 %v1048, %v1051
          %vm1053 = vweird.f32 %v1047
          %vm1054 = vweird.f32 %v1048
          %vm1055 = vmor %vm1053, %vm1054
          %v1056 = vsel %vm1055, %v1048, %v1052
          %v1057 = vand.u32 2147483647, %v1047
          %vm1058 = vcmp.eq.f32.partialorder %v1057, 8.507059e+37
          %v1059 = vand.u32 %v1047, 2147483648
          %v1060 = vor.u32 1.1754944e-38, %v1059
          %v1061 = vsel %vm1058, %v1060, %v1056
          %v1062 = vmul.f32 1.0, %v1061
          %v1063 = vadd.f32 %v932, %v1062
          %1064 = vst [vmem:[%s667] sm:$0x3f] %v1063
        $region104: #{tpu_custom_call.1} parent=79 // pred_fallthru
          _
        %p1065 = scmp.lt.s32.totalorder %s36, 1
        %s1066 = scalar_select %p1065, %s36, 1
        %s1067 = smul.addr %s1066, 8
        %s1068 = scalar_lea.vmem %s15, %s1067
        // Predicated region
        $region105: #{tpu_custom_call.1} parent=79 // pred_check
          %p1069 = pneg %p410
        $region106: #{tpu_custom_call.1} parent=79 // pred_check_branch
          %1071 = sbr.rel (%p1069) target = $region108
        $region107: #{tpu_custom_call.1} parent=79 // pred_region
          _
        $region108: #{tpu_custom_call.1} parent=79 // pred_fallthru
          _
      $region80: #{tpu_custom_call.1} parent=5 // pred_fallthru
        _
      %p1072 = scmp.le.s32.totalorder 2, %s26
      // Predicated region
      $region109: #{tpu_custom_call.1} parent=5 // pred_check
        %p1073 = pneg %p1072
      $region110: #{tpu_custom_call.1} parent=5 // pred_check_branch
        %1075 = sbr.rel (%p1073) target = $region112
      $region111: #{tpu_custom_call.1} parent=5 // pred_region
        %s1076 = ssub.s32 %s26, 2
        // Predicated region
        $region113: #{tpu_custom_call.1} parent=111 // pred_check
          %p1077 = pneg %p416
        $region114: #{tpu_custom_call.1} parent=111 // pred_check_branch
          %1079 = sbr.rel (%p1077) target = $region116
        $region115: #{tpu_custom_call.1} parent=111 // pred_region
          %p1080 = scmp.lt.s32.totalorder %s39, 1
          %s1081 = scalar_select %p1080, %s39, 1
          %s1082 = smul.addr %s1081, 8
          %s1083 = scalar_lea.vmem %s15, %s1082
        $region116: #{tpu_custom_call.1} parent=111 // pred_fallthru
          _
      $region112: #{tpu_custom_call.1} parent=5 // pred_fallthru
        _
    $region6: #{tpu_custom_call.1} parent=1 // loop_footer
      %s30 = sadd.s32 1, %s26
    $region7: #{tpu_custom_call.1} parent=1 // loop_footer_branch
      %25 = sbr.rel target = $region3
    $region8: #{tpu_custom_call.1} parent=1 // loop_exit
      _
    %1084 = vsyncpa [#allocation6], 1
    %s1085 = scalar_lea.sflag [#allocation6], 1
    %1086 = vsyncpa %s1085, 1
    %1087 = vsyncpa [#allocation8], 1
    %1088 = vsyncpa [#allocation11], 1

</llo_original>
